<compile_context>
chip_gen: v5e
topology: v5e:2x2
jax: 0.10.0
libtpu: 0.0.40
codegen_flags: <defaults>
</compile_context>

<pallas_src>
import functools
import numpy as np
import jax
import jax.numpy as jnp
from jax import lax
from jax.experimental import pallas as pl
from jax.experimental.pallas import tpu as pltpu

MODE_PAD = {'s': 1, 'd': 2, 'y': 2, 'c': 3, 't': 3}

# (dy, dx) offsets used to build the LUT *indices* (a, b, c, d)
IDX_OFFSETS = {
    's': ((0, 0), (0, 1), (1, 0), (1, 1)),
    'd': ((0, 0), (0, 2), (2, 0), (2, 2)),
    'y': ((0, 0), (1, 1), (1, 2), (2, 1)),
    'c': ((0, 0), (0, 1), (0, 2), (0, 3)),
    't': ((0, 0), (1, 1), (2, 2), (3, 3)),
}
# (dy, dx) offsets for the *fractional* parts -- 'c' and 't' deliberately reuse
# the 'y' offsets to reproduce the reference PyTorch code exactly.
FRAC_OFFSETS = {
    's': IDX_OFFSETS['s'],
    'd': IDX_OFFSETS['d'],
    'y': IDX_OFFSETS['y'],
    'c': IDX_OFFSETS['y'],
    't': IDX_OFFSETS['y'],
}

# The 24 simplex cases, transcribed 1:1 from the PyTorch InterpTorchBatch.
# Used only by the pure-JAX reference implementation (validation).
CASES = [
    (('ab', 'bc', 'cd'), (('q-a', '0000'), ('a-b', '1000'), ('b-c', '1100'), ('c-d', '1110'), ('d', '1111'))),
    (('!1', 'ab', 'bc', 'bd'), (('q-a', '0000'), ('a-b', '1000'), ('b-d', '1100'), ('d-c', '1101'), ('c', '1111'))),
    (('!1', '!2', 'ab', 'bc', 'ad'), (('q-a', '0000'), ('a-d', '1000'), ('d-b', '1001'), ('b-c', '1101'), ('c', '1111'))),
    (('!1', '!2', '!3', 'ab', 'bc'), (('q-d', '0000'), ('d-a', '0001'), ('a-b', '1001'), ('b-c', '1101'), ('c', '1111'))),
    (('!bc', 'ab', 'ac', 'bd'), (('q-a', '0000'), ('a-c', '1000'), ('c-b', '1010'), ('b-d', '1110'), ('d', '1111'))),
    (('!bc', '!5', 'ab', 'ac', 'cd'), (('q-a', '0000'), ('a-c', '1000'), ('c-d', '1010'), ('d-b', '1011'), ('b', '1111'))),
    (('!bc', '!5', '!6', 'ab', 'ac', 'ad'), (('q-a', '0000'), ('a-d', '1000'), ('d-c', '1001'), ('c-b', '1011'), ('b', '1111'))),
    (('!bc', '!5', '!6', '!7', 'ab', 'ac'), (('q-d', '0000'), ('d-a', '0001'), ('a-c', '1001'), ('c-b', '1011'), ('b', '1111'))),
    (('!bc', '!ac', 'ab', 'bd'), (('q-c', '0000'), ('c-a', '0010'), ('a-b', '1010'), ('b-d', '1110'), ('d', '1111'))),
    (('!bc', '!ac', '!9', 'ab', 'ad'), (('q-c', '0000'), ('c-a', '0010'), ('a-d', '1010'), ('d-b', '1011'), ('b', '1111'))),
    (('!bc', '!ac', '!9', '!10', 'ab', 'cd'), (('q-c', '0000'), ('c-d', '0010'), ('d-a', '0011'), ('a-b', '1011'), ('b', '1111'))),
    (('!bc', '!ac', '!9', '!10', '!11', 'ab'), (('q-d', '0000'), ('d-c', '0001'), ('c-a', '0011'), ('a-b', '1011'), ('b', '1111'))),
    (('!ab', 'ac', 'cd'), (('q-b', '0000'), ('b-a', '0100'), ('a-c', '1100'), ('c-d', '1110'), ('d', '1111'))),
    (('!ab', '!13', 'ac', 'ad'), (('q-b', '0000'), ('b-a', '0100'), ('a-d', '1100'), ('d-c', '1101'), ('c', '1111'))),
    (('!ab', '!13', '!14', 'ac', 'bd'), (('q-b', '0000'), ('b-d', '0100'), ('d-a', '0101'), ('a-c', '1101'), ('c', '1111'))),
    (('!ab', '!13', '!14', '!15', 'ac'), (('q-d', '0000'), ('d-b', '0001'), ('b-a', '0101'), ('a-c', '1101'), ('c', '1111'))),
    (('!ab', '!ac', 'bc', 'ad'), (('q-b', '0000'), ('b-c', '0100'), ('c-a', '0110'), ('a-d', '1110'), ('d', '1111'))),
    (('!ab', '!ac', '!17', 'bc', 'cd'), (('q-b', '0000'), ('b-c', '0100'), ('c-d', '0110'), ('d-a', '0111'), ('a', '1111'))),
    (('!ab', '!ac', '!17', '!18', 'bc', 'bd'), (('q-b', '0000'), ('b-d', '0100'), ('d-c', '0101'), ('c-a', '0111'), ('a', '1111'))),
    (('!ab', '!ac', '!17', '!18', '!19', 'bc'), (('q-d', '0000'), ('d-b', '0001'), ('b-c', '0101'), ('c-a', '0111'), ('a', '1111'))),
    (('!ab', '!ac', '!bc', 'ad'), (('q-c', '0000'), ('c-b', '0010'), ('b-a', '0110'), ('a-d', '1110'), ('d', '1111'))),
    (('!ab', '!ac', '!bc', '!21', 'bd'), (('q-c', '0000'), ('c-b', '0010'), ('b-d', '0110'), ('d-a', '0111'), ('a', '1111'))),
    (('!ab', '!ac', '!bc', '!21', '!22', 'cd'), (('q-c', '0000'), ('c-d', '0010'), ('d-b', '0011'), ('b-a', '0111'), ('a', '1111'))),
    (('!ab', '!ac', '!bc', '!21', '!22', '!23'), (('q-d', '0000'), ('d-c', '0001'), ('c-b', '0011'), ('b-a', '0111'), ('a', '1111'))),
]

CHUNK = 32   # slab height: native int8 tile rows -> full-tile loads/stores only


# ----------------------------------------------------------------------------
# Pallas kernel: closed-form 16-corner-weight simplex blend over (32,128) slabs
# ----------------------------------------------------------------------------
def _swf2lut_kernel(f_ref, p_ref, o_ref, *, q, outC):
    # f_ref: (4, bps, 32, 128) bf16   p_ref: (16*outC, bps, 32, 128) int8
    # o_ref: (outC, bps, 32, 128) f32
    n_chunks = f_ref.shape[1]
    inv_q = 1.0 / q

    def body(ci, carry):
        # full-slab loads on the leading (untiled) dims only; cast to f32 in-kernel
        fa = f_ref[0, ci].astype(jnp.float32)     # (32, 128)
        fb = f_ref[1, ci].astype(jnp.float32)
        fc = f_ref[2, ci].astype(jnp.float32)
        fd = f_ref[3, ci].astype(jnp.float32)

        acc = [None] * outC

        def add_corner(wgt, corner):
            # out[ch] += w_corner * p[corner, ch]  (int8 -> f32 cast in-kernel)
            for ch in range(outC):
                term = wgt * p_ref[ch * 16 + corner, ci].astype(jnp.float32)
                acc[ch] = term if acc[ch] is None else acc[ch] + term

        relu = lambda x: jnp.maximum(x, 0.0)

        # Only 4 cached intermediates (plus fa..fd and the 3 accumulators) stay
        # live across the corner sequence; every other max/min is single-use and
        # consumed inline, keeping the (32,128)=4-vreg working set within the
        # 64-entry register file (no spills).
        max_ab = jnp.maximum(fa, fb)
        max_cd = jnp.maximum(fc, fd)
        min_ab = jnp.minimum(fa, fb)
        min_cd = jnp.minimum(fc, fd)

        # corner 0000: weight q - max(f)
        add_corner(q - jnp.maximum(max_ab, max_cd), 0b0000)
        # singleton corners {a},{b},{c},{d}
        add_corner(relu(fa - jnp.maximum(max_cd, fb)), 0b1000)
        add_corner(relu(fb - jnp.maximum(max_cd, fa)), 0b0100)
        add_corner(relu(fc - jnp.maximum(max_ab, fd)), 0b0010)
        add_corner(relu(fd - jnp.maximum(max_ab, fc)), 0b0001)
        # pair corners
        add_corner(relu(min_ab - max_cd), 0b1100)
        add_corner(relu(jnp.minimum(fa, fc) - jnp.maximum(fb, fd)), 0b1010)
        add_corner(relu(jnp.minimum(fa, fd) - jnp.maximum(fb, fc)), 0b1001)
        add_corner(relu(jnp.minimum(fb, fc) - jnp.maximum(fa, fd)), 0b0110)
        add_corner(relu(jnp.minimum(fb, fd) - jnp.maximum(fa, fc)), 0b0101)
        add_corner(relu(min_cd - max_ab), 0b0011)
        # triple corners
        add_corner(relu(jnp.minimum(min_ab, fc) - fd), 0b1110)
        add_corner(relu(jnp.minimum(min_ab, fd) - fc), 0b1101)
        add_corner(relu(jnp.minimum(min_cd, fa) - fb), 0b1011)
        add_corner(relu(jnp.minimum(min_cd, fb) - fa), 0b0111)
        # corner 1111: weight min(f)
        add_corner(jnp.minimum(min_ab, min_cd), 0b1111)

        for ch in range(outC):
            # full (32,128) lane-dense unmasked store; accumulation stays f32
            # TODO(synk): optionally emit bf16/int8 here if downstream rounds,
            # kept f32 to preserve exact parity with the reference.
            o_ref[ch, ci] = acc[ch] * inv_q
        return carry

    # Partial unroll: the 32-row slab body is already large (good slot fill);
    # unroll=2 keeps the loop visible to the scheduler without code bloat/spills.
    lax.fori_loop(0, n_chunks, body, 0, unroll=min(2, n_chunks))


# ----------------------------------------------------------------------------
# JAX glue: quantize LUT (int8), fractional parts (bf16), 16-corner gather
# ----------------------------------------------------------------------------
def _prepare(weight, outC, mode, img_in, interval, block_px):
    n, c, H, W = img_in.shape
    bd = MODE_PAD[mode]
    h, w = H - bd, W - bd
    q = float(2 ** interval)
    L = 2 ** (8 - interval) + 1

    # weight*127 -> round -> clamp (matches PyTorch).  Values are exact integers
    # in [-127,127], so int8 is lossless and halves both the gather write and the
    # kernel read of the dominant HBM stream.  Stored transposed (outC, L^4) so
    # the gather emits (outC,16,sz) contiguously (reshape below is free).
    wq = jnp.clip(jnp.round(weight * 127.0), -127.0, 127.0)
    wq_t = wq.astype(jnp.int8).T                           # (outC, L^4), ~0.25 MiB

    def crop(dy, dx):
        return img_in[:, :, dy:dy + h, dx:dx + w]

    sz = n * c * h * w
    szp = pl.cdiv(sz, block_px) * block_px
    pad = szp - sz

    # pad the SMALL index / fraction arrays before the gather so the big
    # gathered tensor is produced at its final padded size (no jnp.pad over p).
    a1, b1, c1, d1 = [
        jnp.pad(jnp.floor_divide(crop(dy, dx), q).astype(jnp.int32).reshape(sz), (0, pad))
        for dy, dx in IDX_OFFSETS[mode]]
    # fracs are integers in [0, q-1] <= 255 -> exact in bf16 (asserted by caller).
    fracs = [
        jnp.pad(jnp.mod(crop(dy, dx), q).astype(jnp.bfloat16).reshape(sz), (0, pad))
        for dy, dx in FRAC_OFFSETS[mode]]

    # Single base index + 16 constant corner offsets (broadcast) instead of
    # materializing 16 independent int32 index planes.
    L3, L2 = L ** 3, L ** 2
    base = a1 * L3 + b1 * L2 + c1 * L + d1                               # (szp,)
    offs = jnp.array([((k >> 3) & 1) * L3 + ((k >> 2) & 1) * L2 +
                      ((k >> 1) & 1) * L + (k & 1) for k in range(16)],
                     dtype=jnp.int32)
    flat = base[None, :] + offs[:, None]                                 # (16, szp)

    # TODO(synk): the data-dependent 17^4 LUT gather stays in XLA; an in-kernel
    # VMEM-resident gather (LUT is only ~0.25 MiB int8) would cut HBM traffic
    # further but TPU in-kernel gathers are sublane-serial, so not attempted.
    p = jnp.take(wq_t, flat, axis=1)                       # (outC, 16, szp) int8
    p = p.reshape(outC * 16, szp)                          # free reshape
    f = jnp.stack(fracs, axis=0)                           # (4, szp) bf16
    return f, p, (n, c, h, w), q, sz


def _finalize(out_flat, outC, n, c, h, w, sz):
    # (outC, szp) -> (n, c*outC, h, w), matching the PyTorch permute/reshape
    out = out_flat[:, :sz].reshape(outC, n, c, h, w)
    return jnp.transpose(out, (1, 2, 0, 3, 4)).reshape(n, c * outC, h, w)


def swf2lut_forward(weight, outC, mode, img_in, interval, tm=512):
    """Pallas-accelerated equivalent of SWF2LUT.forward(x, stage, mode, r)."""
    assert interval <= 8, "bf16 fractional storage requires q = 2**interval <= 256"
    assert tm % CHUNK == 0, "tm must be a multiple of 32 (native int8 tile rows)"

    # Adapt the block size for small inputs so padding stays bounded; for large
    # images tm=512 gives ~4.3 MiB/step (~8.6 MiB double-buffered), inside the
    # scoped-VMEM defaults of v5e (16 MiB) and v6e/v7x (32 MiB).
    n0, c0, H0, W0 = img_in.shape
    bd = MODE_PAD[mode]
    sz0 = n0 * c0 * (H0 - bd) * (W0 - bd)
    rows_needed = pl.cdiv(sz0, 128)
    tm_eff = max(CHUNK, min(tm, int(pl.cdiv(rows_needed, CHUNK)) * CHUNK))
    block_px = tm_eff * 128

    f, p, (n, c, h, w), q, sz = _prepare(weight, outC, mode, img_in, interval, block_px)
    szp = f.shape[1]
    nb = szp // (CHUNK * 128)        # total (32,128) slabs
    bps = tm_eff // CHUNK            # slabs per grid step
    grid = (nb // bps,)
    # NOTE(v7x): for best megacore use pick tm so the grid length is >= 2 & even.

    f4 = f.reshape(4, nb, CHUNK, 128)                 # bf16, free reshape
    p4 = p.reshape(16 * outC, nb, CHUNK, 128)         # int8, free reshape

    cost = pl.CostEstimate(
        flops=int(szp * (48 + 34 * outC)),
        transcendentals=0,
        bytes_accessed=int(f4.size * 2 + p4.size * 1 + outC * szp * 4))

    out = pl.pallas_call(
        functools.partial(_swf2lut_kernel, q=q, outC=outC),
        out_shape=jax.ShapeDtypeStruct((outC, nb, CHUNK, 128), jnp.float32),
        grid_spec=pltpu.PrefetchScalarGridSpec(
            num_scalar_prefetch=0,
            grid=grid,
            in_specs=[
                pl.BlockSpec((4, bps, CHUNK, 128), lambda i: (0, i, 0, 0)),
                pl.BlockSpec((16 * outC, bps, CHUNK, 128), lambda i: (0, i, 0, 0)),
            ],
            out_specs=pl.BlockSpec((outC, bps, CHUNK, 128), lambda i: (0, i, 0, 0)),
        ),
        compiler_params=pltpu.CompilerParams(
            dimension_semantics=("parallel",)),   # v7x: shard grid across 2 TCs
        cost_estimate=cost,
    )(f4, p4)

    return _finalize(out.reshape(outC, szp), outC, n, c, h, w, sz)


# ----------------------------------------------------------------------------
# Pure-JAX reference: exact mirror of the PyTorch 24-case blend (validation)
# ----------------------------------------------------------------------------
def _compute_blend(fa, fb, fc, fd, get_p, q, outC):
    f = {'a': fa, 'b': fb, 'c': fc, 'd': fd}
    base = {
        'ab': fa > fb, 'ac': fa > fc, 'ad': fa > fd,
        'bc': fb > fc, 'bd': fb > fd, 'cd': fc > fd,
    }

    def coef(expr):
        if expr.startswith('q-'):
            return q - f[expr[2:]]
        if '-' in expr:
            x, y = expr.split('-')
            return f[x] - f[y]
        return f[expr]

    masks = []
    case_info = []
    for cond, terms in CASES:
        m = None
        for lit in cond:
            if lit.startswith('!'):
                name = lit[1:]
                v = jnp.logical_not(masks[int(name) - 1] if name.isdigit() else base[name])
            else:
                v = base[lit]
            m = v if m is None else jnp.logical_and(m, v)
        masks.append(m)
        case_info.append((m, [coef(t[0]) for t in terms], [int(t[1], 2) for t in terms]))

    outs = []
    for ch in range(outC):
        acc = jnp.zeros_like(fa)
        for m, coefs, corners in case_info:
            val = coefs[0] * get_p(corners[0], ch)
            for cc, kk in zip(coefs[1:], corners[1:]):
                val = val + cc * get_p(kk, ch)
            acc = jnp.where(m, val, acc)   # cases are exclusive & exhaustive
        outs.append(acc / q)
    return outs


def swf2lut_forward_ref(weight, outC, mode, img_in, interval):
    f, p, (n, c, h, w), q, sz = _prepare(weight, outC, mode, img_in, interval, 128)
    szp = f.shape[1]
    fa, fb, fc, fd = [f[i].astype(jnp.float32).reshape(1, szp) for i in range(4)]
    pf = p.astype(jnp.float32)
    get_p = lambda k, ch: pf[ch * 16 + k:ch * 16 + k + 1, :]
    outs = _compute_blend(fa, fb, fc, fd, get_p, q, outC)
    return _finalize(jnp.concatenate(outs, axis=0), outC, n, c, h, w, sz)


if __name__ == "__main__":
    key = jax.random.PRNGKey(0)
    k_lut, k_img = jax.random.split(key)

    interval = 4                     # opt.interval
    L = 2 ** (8 - interval) + 1      # 17
    outC = 3                         # stage-2 LUT outputs 3 channels
    mode = 's'                       # simplest sampling pattern, pad = 1

    # Deterministic synthetic stage-2 LUT parameter (shape (L^4, outC)),
    # analogous to np.load(LUT_s2_sr0.npy).reshape(-1, outC) / 127.
    weight = jax.random.uniform(k_lut, (L ** 4, outC), jnp.float32, -1.0, 1.0)

    # Input image: integer-valued [0, 255] as produced by round(x*255) in predict().
    x = jnp.round(jax.random.uniform(k_img, (2, 1, 16, 16), jnp.float32) * 255.0)
    pad = MODE_PAD[mode]
    x_pad = jnp.pad(x, ((0, 0), (0, 0), (0, pad), (0, pad)), mode='edge')  # F.pad replicate

    out = swf2lut_forward(weight, outC, mode, x_pad, interval)
    out = jax.block_until_ready(out)

    ref = swf2lut_forward_ref(weight, outC, mode, x_pad, interval)
    assert out.shape == (2, 1 * outC, 16, 16), out.shape
    np.testing.assert_allclose(np.asarray(out), np.asarray(ref), rtol=0, atol=1e-4)

    print("KERNEL_OK")
</pallas_src>

<mosaic_0001>
module attributes {stable_mosaic.version = 11 : i64} {
  func.func @_swf2lut_kernel(%arg0: i32, %arg1: memref<4x1x32x128xbf16, #tpu.memory_space<vmem>>, %arg2: memref<48x1x32x128xi8, #tpu.memory_space<vmem>>, %arg3: memref<3x1x32x128xf32, #tpu.memory_space<vmem>>) attributes {dimension_semantics = [#tpu.dimension_semantics<parallel>], iteration_bounds = array<i64: 1>, scalar_prefetch = 0 : i64, scratch_operands = 0 : i64, tpu.core_type = #tpu.core_type<tc>, window_params = [{transform_indices = @transform_0, window_bounds = array<i64: 4, 1, 32, 128>}, {transform_indices = @transform_1, window_bounds = array<i64: 48, 1, 32, 128>}, {transform_indices = @transform_2, window_bounds = array<i64: 3, 1, 32, 128>}]} {
    %c0_i32 = arith.constant 0 : i32
    %c0 = arith.constant 0 : index
    %0 = arith.index_cast %c0_i32 : i32 to index
    %c0_0 = arith.constant 0 : index
    %c0_1 = arith.constant 0 : index
    %1 = vector.load %arg1[%c0, %0, %c0_0, %c0_1] : memref<4x1x32x128xbf16, #tpu.memory_space<vmem>>, vector<1x1x32x128xbf16>
    %2 = vector.shape_cast %1 : vector<1x1x32x128xbf16> to vector<32x128xbf16>
    %3 = arith.extf %2 : vector<32x128xbf16> to vector<32x128xf32>
    %c1 = arith.constant 1 : index
    %4 = arith.index_cast %c0_i32 : i32 to index
    %c0_2 = arith.constant 0 : index
    %c0_3 = arith.constant 0 : index
    %5 = vector.load %arg1[%c1, %4, %c0_2, %c0_3] : memref<4x1x32x128xbf16, #tpu.memory_space<vmem>>, vector<1x1x32x128xbf16>
    %6 = vector.shape_cast %5 : vector<1x1x32x128xbf16> to vector<32x128xbf16>
    %7 = arith.extf %6 : vector<32x128xbf16> to vector<32x128xf32>
    %c2 = arith.constant 2 : index
    %8 = arith.index_cast %c0_i32 : i32 to index
    %c0_4 = arith.constant 0 : index
    %c0_5 = arith.constant 0 : index
    %9 = vector.load %arg1[%c2, %8, %c0_4, %c0_5] : memref<4x1x32x128xbf16, #tpu.memory_space<vmem>>, vector<1x1x32x128xbf16>
    %10 = vector.shape_cast %9 : vector<1x1x32x128xbf16> to vector<32x128xbf16>
    %11 = arith.extf %10 : vector<32x128xbf16> to vector<32x128xf32>
    %c3 = arith.constant 3 : index
    %12 = arith.index_cast %c0_i32 : i32 to index
    %c0_6 = arith.constant 0 : index
    %c0_7 = arith.constant 0 : index
    %13 = vector.load %arg1[%c3, %12, %c0_6, %c0_7] : memref<4x1x32x128xbf16, #tpu.memory_space<vmem>>, vector<1x1x32x128xbf16>
    %14 = vector.shape_cast %13 : vector<1x1x32x128xbf16> to vector<32x128xbf16>
    %15 = arith.extf %14 : vector<32x128xbf16> to vector<32x128xf32>
    %16 = arith.maximumf %3, %7 : vector<32x128xf32>
    %17 = arith.maximumf %11, %15 : vector<32x128xf32>
    %18 = arith.minimumf %3, %7 : vector<32x128xf32>
    %19 = arith.minimumf %11, %15 : vector<32x128xf32>
    %20 = arith.maximumf %16, %17 : vector<32x128xf32>
    %cst = arith.constant 1.600000e+01 : f32
    %21 = vector.broadcast %cst : f32 to vector<32x128xf32>
    %22 = arith.subf %21, %20 : vector<32x128xf32>
    %c0_8 = arith.constant 0 : index
    %23 = arith.index_cast %c0_i32 : i32 to index
    %c0_9 = arith.constant 0 : index
    %c0_10 = arith.constant 0 : index
    %24 = vector.load %arg2[%c0_8, %23, %c0_9, %c0_10] : memref<48x1x32x128xi8, #tpu.memory_space<vmem>>, vector<1x1x32x128xi8>
    %25 = vector.shape_cast %24 : vector<1x1x32x128xi8> to vector<32x128xi8>
    %26 = arith.sitofp %25 : vector<32x128xi8> to vector<32x128xf32>
    %27 = arith.mulf %22, %26 : vector<32x128xf32>
    %c16 = arith.constant 16 : index
    %28 = arith.index_cast %c0_i32 : i32 to index
    %c0_11 = arith.constant 0 : index
    %c0_12 = arith.constant 0 : index
    %29 = vector.load %arg2[%c16, %28, %c0_11, %c0_12] : memref<48x1x32x128xi8, #tpu.memory_space<vmem>>, vector<1x1x32x128xi8>
    %30 = vector.shape_cast %29 : vector<1x1x32x128xi8> to vector<32x128xi8>
    %31 = arith.sitofp %30 : vector<32x128xi8> to vector<32x128xf32>
    %32 = arith.mulf %22, %31 : vector<32x128xf32>
    %c32 = arith.constant 32 : index
    %33 = arith.index_cast %c0_i32 : i32 to index
    %c0_13 = arith.constant 0 : index
    %c0_14 = arith.constant 0 : index
    %34 = vector.load %arg2[%c32, %33, %c0_13, %c0_14] : memref<48x1x32x128xi8, #tpu.memory_space<vmem>>, vector<1x1x32x128xi8>
    %35 = vector.shape_cast %34 : vector<1x1x32x128xi8> to vector<32x128xi8>
    %36 = arith.sitofp %35 : vector<32x128xi8> to vector<32x128xf32>
    %37 = arith.mulf %22, %36 : vector<32x128xf32>
    %38 = arith.maximumf %17, %7 : vector<32x128xf32>
    %39 = arith.subf %3, %38 : vector<32x128xf32>
    %cst_15 = arith.constant 0.000000e+00 : f32
    %40 = vector.broadcast %cst_15 : f32 to vector<32x128xf32>
    %41 = arith.maximumf %39, %40 : vector<32x128xf32>
    %c8 = arith.constant 8 : index
    %42 = arith.index_cast %c0_i32 : i32 to index
    %c0_16 = arith.constant 0 : index
    %c0_17 = arith.constant 0 : index
    %43 = vector.load %arg2[%c8, %42, %c0_16, %c0_17] : memref<48x1x32x128xi8, #tpu.memory_space<vmem>>, vector<1x1x32x128xi8>
    %44 = vector.shape_cast %43 : vector<1x1x32x128xi8> to vector<32x128xi8>
    %45 = arith.sitofp %44 : vector<32x128xi8> to vector<32x128xf32>
    %46 = arith.mulf %41, %45 : vector<32x128xf32>
    %47 = arith.addf %27, %46 : vector<32x128xf32>
    %c24 = arith.constant 24 : index
    %48 = arith.index_cast %c0_i32 : i32 to index
    %c0_18 = arith.constant 0 : index
    %c0_19 = arith.constant 0 : index
    %49 = vector.load %arg2[%c24, %48, %c0_18, %c0_19] : memref<48x1x32x128xi8, #tpu.memory_space<vmem>>, vector<1x1x32x128xi8>
    %50 = vector.shape_cast %49 : vector<1x1x32x128xi8> to vector<32x128xi8>
    %51 = arith.sitofp %50 : vector<32x128xi8> to vector<32x128xf32>
    %52 = arith.mulf %41, %51 : vector<32x128xf32>
    %53 = arith.addf %32, %52 : vector<32x128xf32>
    %c40 = arith.constant 40 : index
    %54 = arith.index_cast %c0_i32 : i32 to index
    %c0_20 = arith.constant 0 : index
    %c0_21 = arith.constant 0 : index
    %55 = vector.load %arg2[%c40, %54, %c0_20, %c0_21] : memref<48x1x32x128xi8, #tpu.memory_space<vmem>>, vector<1x1x32x128xi8>
    %56 = vector.shape_cast %55 : vector<1x1x32x128xi8> to vector<32x128xi8>
    %57 = arith.sitofp %56 : vector<32x128xi8> to vector<32x128xf32>
    %58 = arith.mulf %41, %57 : vector<32x128xf32>
    %59 = arith.addf %37, %58 : vector<32x128xf32>
    %60 = arith.maximumf %17, %3 : vector<32x128xf32>
    %61 = arith.subf %7, %60 : vector<32x128xf32>
    %cst_22 = arith.constant 0.000000e+00 : f32
    %62 = vector.broadcast %cst_22 : f32 to vector<32x128xf32>
    %63 = arith.maximumf %61, %62 : vector<32x128xf32>
    %c4 = arith.constant 4 : index
    %64 = arith.index_cast %c0_i32 : i32 to index
    %c0_23 = arith.constant 0 : index
    %c0_24 = arith.constant 0 : index
    %65 = vector.load %arg2[%c4, %64, %c0_23, %c0_24] : memref<48x1x32x128xi8, #tpu.memory_space<vmem>>, vector<1x1x32x128xi8>
    %66 = vector.shape_cast %65 : vector<1x1x32x128xi8> to vector<32x128xi8>
    %67 = arith.sitofp %66 : vector<32x128xi8> to vector<32x128xf32>
    %68 = arith.mulf %63, %67 : vector<32x128xf32>
    %69 = arith.addf %47, %68 : vector<32x128xf32>
    %c20 = arith.constant 20 : index
    %70 = arith.index_cast %c0_i32 : i32 to index
    %c0_25 = arith.constant 0 : index
    %c0_26 = arith.constant 0 : index
    %71 = vector.load %arg2[%c20, %70, %c0_25, %c0_26] : memref<48x1x32x128xi8, #tpu.memory_space<vmem>>, vector<1x1x32x128xi8>
    %72 = vector.shape_cast %71 : vector<1x1x32x128xi8> to vector<32x128xi8>
    %73 = arith.sitofp %72 : vector<32x128xi8> to vector<32x128xf32>
    %74 = arith.mulf %63, %73 : vector<32x128xf32>
    %75 = arith.addf %53, %74 : vector<32x128xf32>
    %c36 = arith.constant 36 : index
    %76 = arith.index_cast %c0_i32 : i32 to index
    %c0_27 = arith.constant 0 : index
    %c0_28 = arith.constant 0 : index
    %77 = vector.load %arg2[%c36, %76, %c0_27, %c0_28] : memref<48x1x32x128xi8, #tpu.memory_space<vmem>>, vector<1x1x32x128xi8>
    %78 = vector.shape_cast %77 : vector<1x1x32x128xi8> to vector<32x128xi8>
    %79 = arith.sitofp %78 : vector<32x128xi8> to vector<32x128xf32>
    %80 = arith.mulf %63, %79 : vector<32x128xf32>
    %81 = arith.addf %59, %80 : vector<32x128xf32>
    %82 = arith.maximumf %16, %15 : vector<32x128xf32>
    %83 = arith.subf %11, %82 : vector<32x128xf32>
    %cst_29 = arith.constant 0.000000e+00 : f32
    %84 = vector.broadcast %cst_29 : f32 to vector<32x128xf32>
    %85 = arith.maximumf %83, %84 : vector<32x128xf32>
    %c2_30 = arith.constant 2 : index
    %86 = arith.index_cast %c0_i32 : i32 to index
    %c0_31 = arith.constant 0 : index
    %c0_32 = arith.constant 0 : index
    %87 = vector.load %arg2[%c2_30, %86, %c0_31, %c0_32] : memref<48x1x32x128xi8, #tpu.memory_space<vmem>>, vector<1x1x32x128xi8>
    %88 = vector.shape_cast %87 : vector<1x1x32x128xi8> to vector<32x128xi8>
    %89 = arith.sitofp %88 : vector<32x128xi8> to vector<32x128xf32>
    %90 = arith.mulf %85, %89 : vector<32x128xf32>
    %91 = arith.addf %69, %90 : vector<32x128xf32>
    %c18 = arith.constant 18 : index
    %92 = arith.index_cast %c0_i32 : i32 to index
    %c0_33 = arith.constant 0 : index
    %c0_34 = arith.constant 0 : index
    %93 = vector.load %arg2[%c18, %92, %c0_33, %c0_34] : memref<48x1x32x128xi8, #tpu.memory_space<vmem>>, vector<1x1x32x128xi8>
    %94 = vector.shape_cast %93 : vector<1x1x32x128xi8> to vector<32x128xi8>
    %95 = arith.sitofp %94 : vector<32x128xi8> to vector<32x128xf32>
    %96 = arith.mulf %85, %95 : vector<32x128xf32>
    %97 = arith.addf %75, %96 : vector<32x128xf32>
    %c34 = arith.constant 34 : index
    %98 = arith.index_cast %c0_i32 : i32 to index
    %c0_35 = arith.constant 0 : index
    %c0_36 = arith.constant 0 : index
    %99 = vector.load %arg2[%c34, %98, %c0_35, %c0_36] : memref<48x1x32x128xi8, #tpu.memory_space<vmem>>, vector<1x1x32x128xi8>
    %100 = vector.shape_cast %99 : vector<1x1x32x128xi8> to vector<32x128xi8>
    %101 = arith.sitofp %100 : vector<32x128xi8> to vector<32x128xf32>
    %102 = arith.mulf %85, %101 : vector<32x128xf32>
    %103 = arith.addf %81, %102 : vector<32x128xf32>
    %104 = arith.maximumf %16, %11 : vector<32x128xf32>
    %105 = arith.subf %15, %104 : vector<32x128xf32>
    %cst_37 = arith.constant 0.000000e+00 : f32
    %106 = vector.broadcast %cst_37 : f32 to vector<32x128xf32>
    %107 = arith.maximumf %105, %106 : vector<32x128xf32>
    %c1_38 = arith.constant 1 : index
    %108 = arith.index_cast %c0_i32 : i32 to index
    %c0_39 = arith.constant 0 : index
    %c0_40 = arith.constant 0 : index
    %109 = vector.load %arg2[%c1_38, %108, %c0_39, %c0_40] : memref<48x1x32x128xi8, #tpu.memory_space<vmem>>, vector<1x1x32x128xi8>
    %110 = vector.shape_cast %109 : vector<1x1x32x128xi8> to vector<32x128xi8>
    %111 = arith.sitofp %110 : vector<32x128xi8> to vector<32x128xf32>
    %112 = arith.mulf %107, %111 : vector<32x128xf32>
    %113 = arith.addf %91, %112 : vector<32x128xf32>
    %c17 = arith.constant 17 : index
    %114 = arith.index_cast %c0_i32 : i32 to index
    %c0_41 = arith.constant 0 : index
    %c0_42 = arith.constant 0 : index
    %115 = vector.load %arg2[%c17, %114, %c0_41, %c0_42] : memref<48x1x32x128xi8, #tpu.memory_space<vmem>>, vector<1x1x32x128xi8>
    %116 = vector.shape_cast %115 : vector<1x1x32x128xi8> to vector<32x128xi8>
    %117 = arith.sitofp %116 : vector<32x128xi8> to vector<32x128xf32>
    %118 = arith.mulf %107, %117 : vector<32x128xf32>
    %119 = arith.addf %97, %118 : vector<32x128xf32>
    %c33 = arith.constant 33 : index
    %120 = arith.index_cast %c0_i32 : i32 to index
    %c0_43 = arith.constant 0 : index
    %c0_44 = arith.constant 0 : index
    %121 = vector.load %arg2[%c33, %120, %c0_43, %c0_44] : memref<48x1x32x128xi8, #tpu.memory_space<vmem>>, vector<1x1x32x128xi8>
    %122 = vector.shape_cast %121 : vector<1x1x32x128xi8> to vector<32x128xi8>
    %123 = arith.sitofp %122 : vector<32x128xi8> to vector<32x128xf32>
    %124 = arith.mulf %107, %123 : vector<32x128xf32>
    %125 = arith.addf %103, %124 : vector<32x128xf32>
    %126 = arith.subf %18, %17 : vector<32x128xf32>
    %cst_45 = arith.constant 0.000000e+00 : f32
    %127 = vector.broadcast %cst_45 : f32 to vector<32x128xf32>
    %128 = arith.maximumf %126, %127 : vector<32x128xf32>
    %c12 = arith.constant 12 : index
    %129 = arith.index_cast %c0_i32 : i32 to index
    %c0_46 = arith.constant 0 : index
    %c0_47 = arith.constant 0 : index
    %130 = vector.load %arg2[%c12, %129, %c0_46, %c0_47] : memref<48x1x32x128xi8, #tpu.memory_space<vmem>>, vector<1x1x32x128xi8>
    %131 = vector.shape_cast %130 : vector<1x1x32x128xi8> to vector<32x128xi8>
    %132 = arith.sitofp %131 : vector<32x128xi8> to vector<32x128xf32>
    %133 = arith.mulf %128, %132 : vector<32x128xf32>
    %134 = arith.addf %113, %133 : vector<32x128xf32>
    %c28 = arith.constant 28 : index
    %135 = arith.index_cast %c0_i32 : i32 to index
    %c0_48 = arith.constant 0 : index
    %c0_49 = arith.constant 0 : index
    %136 = vector.load %arg2[%c28, %135, %c0_48, %c0_49] : memref<48x1x32x128xi8, #tpu.memory_space<vmem>>, vector<1x1x32x128xi8>
    %137 = vector.shape_cast %136 : vector<1x1x32x128xi8> to vector<32x128xi8>
    %138 = arith.sitofp %137 : vector<32x128xi8> to vector<32x128xf32>
    %139 = arith.mulf %128, %138 : vector<32x128xf32>
    %140 = arith.addf %119, %139 : vector<32x128xf32>
    %c44 = arith.constant 44 : index
    %141 = arith.index_cast %c0_i32 : i32 to index
    %c0_50 = arith.constant 0 : index
    %c0_51 = arith.constant 0 : index
    %142 = vector.load %arg2[%c44, %141, %c0_50, %c0_51] : memref<48x1x32x128xi8, #tpu.memory_space<vmem>>, vector<1x1x32x128xi8>
    %143 = vector.shape_cast %142 : vector<1x1x32x128xi8> to vector<32x128xi8>
    %144 = arith.sitofp %143 : vector<32x128xi8> to vector<32x128xf32>
    %145 = arith.mulf %128, %144 : vector<32x128xf32>
    %146 = arith.addf %125, %145 : vector<32x128xf32>
    %147 = arith.minimumf %3, %11 : vector<32x128xf32>
    %148 = arith.maximumf %7, %15 : vector<32x128xf32>
    %149 = arith.subf %147, %148 : vector<32x128xf32>
    %cst_52 = arith.constant 0.000000e+00 : f32
    %150 = vector.broadcast %cst_52 : f32 to vector<32x128xf32>
    %151 = arith.maximumf %149, %150 : vector<32x128xf32>
    %c10 = arith.constant 10 : index
    %152 = arith.index_cast %c0_i32 : i32 to index
    %c0_53 = arith.constant 0 : index
    %c0_54 = arith.constant 0 : index
    %153 = vector.load %arg2[%c10, %152, %c0_53, %c0_54] : memref<48x1x32x128xi8, #tpu.memory_space<vmem>>, vector<1x1x32x128xi8>
    %154 = vector.shape_cast %153 : vector<1x1x32x128xi8> to vector<32x128xi8>
    %155 = arith.sitofp %154 : vector<32x128xi8> to vector<32x128xf32>
    %156 = arith.mulf %151, %155 : vector<32x128xf32>
    %157 = arith.addf %134, %156 : vector<32x128xf32>
    %c26 = arith.constant 26 : index
    %158 = arith.index_cast %c0_i32 : i32 to index
    %c0_55 = arith.constant 0 : index
    %c0_56 = arith.constant 0 : index
    %159 = vector.load %arg2[%c26, %158, %c0_55, %c0_56] : memref<48x1x32x128xi8, #tpu.memory_space<vmem>>, vector<1x1x32x128xi8>
    %160 = vector.shape_cast %159 : vector<1x1x32x128xi8> to vector<32x128xi8>
    %161 = arith.sitofp %160 : vector<32x128xi8> to vector<32x128xf32>
    %162 = arith.mulf %151, %161 : vector<32x128xf32>
    %163 = arith.addf %140, %162 : vector<32x128xf32>
    %c42 = arith.constant 42 : index
    %164 = arith.index_cast %c0_i32 : i32 to index
    %c0_57 = arith.constant 0 : index
    %c0_58 = arith.constant 0 : index
    %165 = vector.load %arg2[%c42, %164, %c0_57, %c0_58] : memref<48x1x32x128xi8, #tpu.memory_space<vmem>>, vector<1x1x32x128xi8>
    %166 = vector.shape_cast %165 : vector<1x1x32x128xi8> to vector<32x128xi8>
    %167 = arith.sitofp %166 : vector<32x128xi8> to vector<32x128xf32>
    %168 = arith.mulf %151, %167 : vector<32x128xf32>
    %169 = arith.addf %146, %168 : vector<32x128xf32>
    %170 = arith.minimumf %3, %15 : vector<32x128xf32>
    %171 = arith.maximumf %7, %11 : vector<32x128xf32>
    %172 = arith.subf %170, %171 : vector<32x128xf32>
    %cst_59 = arith.constant 0.000000e+00 : f32
    %173 = vector.broadcast %cst_59 : f32 to vector<32x128xf32>
    %174 = arith.maximumf %172, %173 : vector<32x128xf32>
    %c9 = arith.constant 9 : index
    %175 = arith.index_cast %c0_i32 : i32 to index
    %c0_60 = arith.constant 0 : index
    %c0_61 = arith.constant 0 : index
    %176 = vector.load %arg2[%c9, %175, %c0_60, %c0_61] : memref<48x1x32x128xi8, #tpu.memory_space<vmem>>, vector<1x1x32x128xi8>
    %177 = vector.shape_cast %176 : vector<1x1x32x128xi8> to vector<32x128xi8>
    %178 = arith.sitofp %177 : vector<32x128xi8> to vector<32x128xf32>
    %179 = arith.mulf %174, %178 : vector<32x128xf32>
    %180 = arith.addf %157, %179 : vector<32x128xf32>
    %c25 = arith.constant 25 : index
    %181 = arith.index_cast %c0_i32 : i32 to index
    %c0_62 = arith.constant 0 : index
    %c0_63 = arith.constant 0 : index
    %182 = vector.load %arg2[%c25, %181, %c0_62, %c0_63] : memref<48x1x32x128xi8, #tpu.memory_space<vmem>>, vector<1x1x32x128xi8>
    %183 = vector.shape_cast %182 : vector<1x1x32x128xi8> to vector<32x128xi8>
    %184 = arith.sitofp %183 : vector<32x128xi8> to vector<32x128xf32>
    %185 = arith.mulf %174, %184 : vector<32x128xf32>
    %186 = arith.addf %163, %185 : vector<32x128xf32>
    %c41 = arith.constant 41 : index
    %187 = arith.index_cast %c0_i32 : i32 to index
    %c0_64 = arith.constant 0 : index
    %c0_65 = arith.constant 0 : index
    %188 = vector.load %arg2[%c41, %187, %c0_64, %c0_65] : memref<48x1x32x128xi8, #tpu.memory_space<vmem>>, vector<1x1x32x128xi8>
    %189 = vector.shape_cast %188 : vector<1x1x32x128xi8> to vector<32x128xi8>
    %190 = arith.sitofp %189 : vector<32x128xi8> to vector<32x128xf32>
    %191 = arith.mulf %174, %190 : vector<32x128xf32>
    %192 = arith.addf %169, %191 : vector<32x128xf32>
    %193 = arith.minimumf %7, %11 : vector<32x128xf32>
    %194 = arith.maximumf %3, %15 : vector<32x128xf32>
    %195 = arith.subf %193, %194 : vector<32x128xf32>
    %cst_66 = arith.constant 0.000000e+00 : f32
    %196 = vector.broadcast %cst_66 : f32 to vector<32x128xf32>
    %197 = arith.maximumf %195, %196 : vector<32x128xf32>
    %c6 = arith.constant 6 : index
    %198 = arith.index_cast %c0_i32 : i32 to index
    %c0_67 = arith.constant 0 : index
    %c0_68 = arith.constant 0 : index
    %199 = vector.load %arg2[%c6, %198, %c0_67, %c0_68] : memref<48x1x32x128xi8, #tpu.memory_space<vmem>>, vector<1x1x32x128xi8>
    %200 = vector.shape_cast %199 : vector<1x1x32x128xi8> to vector<32x128xi8>
    %201 = arith.sitofp %200 : vector<32x128xi8> to vector<32x128xf32>
    %202 = arith.mulf %197, %201 : vector<32x128xf32>
    %203 = arith.addf %180, %202 : vector<32x128xf32>
    %c22 = arith.constant 22 : index
    %204 = arith.index_cast %c0_i32 : i32 to index
    %c0_69 = arith.constant 0 : index
    %c0_70 = arith.constant 0 : index
    %205 = vector.load %arg2[%c22, %204, %c0_69, %c0_70] : memref<48x1x32x128xi8, #tpu.memory_space<vmem>>, vector<1x1x32x128xi8>
    %206 = vector.shape_cast %205 : vector<1x1x32x128xi8> to vector<32x128xi8>
    %207 = arith.sitofp %206 : vector<32x128xi8> to vector<32x128xf32>
    %208 = arith.mulf %197, %207 : vector<32x128xf32>
    %209 = arith.addf %186, %208 : vector<32x128xf32>
    %c38 = arith.constant 38 : index
    %210 = arith.index_cast %c0_i32 : i32 to index
    %c0_71 = arith.constant 0 : index
    %c0_72 = arith.constant 0 : index
    %211 = vector.load %arg2[%c38, %210, %c0_71, %c0_72] : memref<48x1x32x128xi8, #tpu.memory_space<vmem>>, vector<1x1x32x128xi8>
    %212 = vector.shape_cast %211 : vector<1x1x32x128xi8> to vector<32x128xi8>
    %213 = arith.sitofp %212 : vector<32x128xi8> to vector<32x128xf32>
    %214 = arith.mulf %197, %213 : vector<32x128xf32>
    %215 = arith.addf %192, %214 : vector<32x128xf32>
    %216 = arith.minimumf %7, %15 : vector<32x128xf32>
    %217 = arith.maximumf %3, %11 : vector<32x128xf32>
    %218 = arith.subf %216, %217 : vector<32x128xf32>
    %cst_73 = arith.constant 0.000000e+00 : f32
    %219 = vector.broadcast %cst_73 : f32 to vector<32x128xf32>
    %220 = arith.maximumf %218, %219 : vector<32x128xf32>
    %c5 = arith.constant 5 : index
    %221 = arith.index_cast %c0_i32 : i32 to index
    %c0_74 = arith.constant 0 : index
    %c0_75 = arith.constant 0 : index
    %222 = vector.load %arg2[%c5, %221, %c0_74, %c0_75] : memref<48x1x32x128xi8, #tpu.memory_space<vmem>>, vector<1x1x32x128xi8>
    %223 = vector.shape_cast %222 : vector<1x1x32x128xi8> to vector<32x128xi8>
    %224 = arith.sitofp %223 : vector<32x128xi8> to vector<32x128xf32>
    %225 = arith.mulf %220, %224 : vector<32x128xf32>
    %226 = arith.addf %203, %225 : vector<32x128xf32>
    %c21 = arith.constant 21 : index
    %227 = arith.index_cast %c0_i32 : i32 to index
    %c0_76 = arith.constant 0 : index
    %c0_77 = arith.constant 0 : index
    %228 = vector.load %arg2[%c21, %227, %c0_76, %c0_77] : memref<48x1x32x128xi8, #tpu.memory_space<vmem>>, vector<1x1x32x128xi8>
    %229 = vector.shape_cast %228 : vector<1x1x32x128xi8> to vector<32x128xi8>
    %230 = arith.sitofp %229 : vector<32x128xi8> to vector<32x128xf32>
    %231 = arith.mulf %220, %230 : vector<32x128xf32>
    %232 = arith.addf %209, %231 : vector<32x128xf32>
    %c37 = arith.constant 37 : index
    %233 = arith.index_cast %c0_i32 : i32 to index
    %c0_78 = arith.constant 0 : index
    %c0_79 = arith.constant 0 : index
    %234 = vector.load %arg2[%c37, %233, %c0_78, %c0_79] : memref<48x1x32x128xi8, #tpu.memory_space<vmem>>, vector<1x1x32x128xi8>
    %235 = vector.shape_cast %234 : vector<1x1x32x128xi8> to vector<32x128xi8>
    %236 = arith.sitofp %235 : vector<32x128xi8> to vector<32x128xf32>
    %237 = arith.mulf %220, %236 : vector<32x128xf32>
    %238 = arith.addf %215, %237 : vector<32x128xf32>
    %239 = arith.subf %19, %16 : vector<32x128xf32>
    %cst_80 = arith.constant 0.000000e+00 : f32
    %240 = vector.broadcast %cst_80 : f32 to vector<32x128xf32>
    %241 = arith.maximumf %239, %240 : vector<32x128xf32>
    %c3_81 = arith.constant 3 : index
    %242 = arith.index_cast %c0_i32 : i32 to index
    %c0_82 = arith.constant 0 : index
    %c0_83 = arith.constant 0 : index
    %243 = vector.load %arg2[%c3_81, %242, %c0_82, %c0_83] : memref<48x1x32x128xi8, #tpu.memory_space<vmem>>, vector<1x1x32x128xi8>
    %244 = vector.shape_cast %243 : vector<1x1x32x128xi8> to vector<32x128xi8>
    %245 = arith.sitofp %244 : vector<32x128xi8> to vector<32x128xf32>
    %246 = arith.mulf %241, %245 : vector<32x128xf32>
    %247 = arith.addf %226, %246 : vector<32x128xf32>
    %c19 = arith.constant 19 : index
    %248 = arith.index_cast %c0_i32 : i32 to index
    %c0_84 = arith.constant 0 : index
    %c0_85 = arith.constant 0 : index
    %249 = vector.load %arg2[%c19, %248, %c0_84, %c0_85] : memref<48x1x32x128xi8, #tpu.memory_space<vmem>>, vector<1x1x32x128xi8>
    %250 = vector.shape_cast %249 : vector<1x1x32x128xi8> to vector<32x128xi8>
    %251 = arith.sitofp %250 : vector<32x128xi8> to vector<32x128xf32>
    %252 = arith.mulf %241, %251 : vector<32x128xf32>
    %253 = arith.addf %232, %252 : vector<32x128xf32>
    %c35 = arith.constant 35 : index
    %254 = arith.index_cast %c0_i32 : i32 to index
    %c0_86 = arith.constant 0 : index
    %c0_87 = arith.constant 0 : index
    %255 = vector.load %arg2[%c35, %254, %c0_86, %c0_87] : memref<48x1x32x128xi8, #tpu.memory_space<vmem>>, vector<1x1x32x128xi8>
    %256 = vector.shape_cast %255 : vector<1x1x32x128xi8> to vector<32x128xi8>
    %257 = arith.sitofp %256 : vector<32x128xi8> to vector<32x128xf32>
    %258 = arith.mulf %241, %257 : vector<32x128xf32>
    %259 = arith.addf %238, %258 : vector<32x128xf32>
    %260 = arith.minimumf %18, %11 : vector<32x128xf32>
    %261 = arith.subf %260, %15 : vector<32x128xf32>
    %cst_88 = arith.constant 0.000000e+00 : f32
    %262 = vector.broadcast %cst_88 : f32 to vector<32x128xf32>
    %263 = arith.maximumf %261, %262 : vector<32x128xf32>
    %c14 = arith.constant 14 : index
    %264 = arith.index_cast %c0_i32 : i32 to index
    %c0_89 = arith.constant 0 : index
    %c0_90 = arith.constant 0 : index
    %265 = vector.load %arg2[%c14, %264, %c0_89, %c0_90] : memref<48x1x32x128xi8, #tpu.memory_space<vmem>>, vector<1x1x32x128xi8>
    %266 = vector.shape_cast %265 : vector<1x1x32x128xi8> to vector<32x128xi8>
    %267 = arith.sitofp %266 : vector<32x128xi8> to vector<32x128xf32>
    %268 = arith.mulf %263, %267 : vector<32x128xf32>
    %269 = arith.addf %247, %268 : vector<32x128xf32>
    %c30 = arith.constant 30 : index
    %270 = arith.index_cast %c0_i32 : i32 to index
    %c0_91 = arith.constant 0 : index
    %c0_92 = arith.constant 0 : index
    %271 = vector.load %arg2[%c30, %270, %c0_91, %c0_92] : memref<48x1x32x128xi8, #tpu.memory_space<vmem>>, vector<1x1x32x128xi8>
    %272 = vector.shape_cast %271 : vector<1x1x32x128xi8> to vector<32x128xi8>
    %273 = arith.sitofp %272 : vector<32x128xi8> to vector<32x128xf32>
    %274 = arith.mulf %263, %273 : vector<32x128xf32>
    %275 = arith.addf %253, %274 : vector<32x128xf32>
    %c46 = arith.constant 46 : index
    %276 = arith.index_cast %c0_i32 : i32 to index
    %c0_93 = arith.constant 0 : index
    %c0_94 = arith.constant 0 : index
    %277 = vector.load %arg2[%c46, %276, %c0_93, %c0_94] : memref<48x1x32x128xi8, #tpu.memory_space<vmem>>, vector<1x1x32x128xi8>
    %278 = vector.shape_cast %277 : vector<1x1x32x128xi8> to vector<32x128xi8>
    %279 = arith.sitofp %278 : vector<32x128xi8> to vector<32x128xf32>
    %280 = arith.mulf %263, %279 : vector<32x128xf32>
    %281 = arith.addf %259, %280 : vector<32x128xf32>
    %282 = arith.minimumf %18, %15 : vector<32x128xf32>
    %283 = arith.subf %282, %11 : vector<32x128xf32>
    %cst_95 = arith.constant 0.000000e+00 : f32
    %284 = vector.broadcast %cst_95 : f32 to vector<32x128xf32>
    %285 = arith.maximumf %283, %284 : vector<32x128xf32>
    %c13 = arith.constant 13 : index
    %286 = arith.index_cast %c0_i32 : i32 to index
    %c0_96 = arith.constant 0 : index
    %c0_97 = arith.constant 0 : index
    %287 = vector.load %arg2[%c13, %286, %c0_96, %c0_97] : memref<48x1x32x128xi8, #tpu.memory_space<vmem>>, vector<1x1x32x128xi8>
    %288 = vector.shape_cast %287 : vector<1x1x32x128xi8> to vector<32x128xi8>
    %289 = arith.sitofp %288 : vector<32x128xi8> to vector<32x128xf32>
    %290 = arith.mulf %285, %289 : vector<32x128xf32>
    %291 = arith.addf %269, %290 : vector<32x128xf32>
    %c29 = arith.constant 29 : index
    %292 = arith.index_cast %c0_i32 : i32 to index
    %c0_98 = arith.constant 0 : index
    %c0_99 = arith.constant 0 : index
    %293 = vector.load %arg2[%c29, %292, %c0_98, %c0_99] : memref<48x1x32x128xi8, #tpu.memory_space<vmem>>, vector<1x1x32x128xi8>
    %294 = vector.shape_cast %293 : vector<1x1x32x128xi8> to vector<32x128xi8>
    %295 = arith.sitofp %294 : vector<32x128xi8> to vector<32x128xf32>
    %296 = arith.mulf %285, %295 : vector<32x128xf32>
    %297 = arith.addf %275, %296 : vector<32x128xf32>
    %c45 = arith.constant 45 : index
    %298 = arith.index_cast %c0_i32 : i32 to index
    %c0_100 = arith.constant 0 : index
    %c0_101 = arith.constant 0 : index
    %299 = vector.load %arg2[%c45, %298, %c0_100, %c0_101] : memref<48x1x32x128xi8, #tpu.memory_space<vmem>>, vector<1x1x32x128xi8>
    %300 = vector.shape_cast %299 : vector<1x1x32x128xi8> to vector<32x128xi8>
    %301 = arith.sitofp %300 : vector<32x128xi8> to vector<32x128xf32>
    %302 = arith.mulf %285, %301 : vector<32x128xf32>
    %303 = arith.addf %281, %302 : vector<32x128xf32>
    %304 = arith.minimumf %19, %3 : vector<32x128xf32>
    %305 = arith.subf %304, %7 : vector<32x128xf32>
    %cst_102 = arith.constant 0.000000e+00 : f32
    %306 = vector.broadcast %cst_102 : f32 to vector<32x128xf32>
    %307 = arith.maximumf %305, %306 : vector<32x128xf32>
    %c11 = arith.constant 11 : index
    %308 = arith.index_cast %c0_i32 : i32 to index
    %c0_103 = arith.constant 0 : index
    %c0_104 = arith.constant 0 : index
    %309 = vector.load %arg2[%c11, %308, %c0_103, %c0_104] : memref<48x1x32x128xi8, #tpu.memory_space<vmem>>, vector<1x1x32x128xi8>
    %310 = vector.shape_cast %309 : vector<1x1x32x128xi8> to vector<32x128xi8>
    %311 = arith.sitofp %310 : vector<32x128xi8> to vector<32x128xf32>
    %312 = arith.mulf %307, %311 : vector<32x128xf32>
    %313 = arith.addf %291, %312 : vector<32x128xf32>
    %c27 = arith.constant 27 : index
    %314 = arith.index_cast %c0_i32 : i32 to index
    %c0_105 = arith.constant 0 : index
    %c0_106 = arith.constant 0 : index
    %315 = vector.load %arg2[%c27, %314, %c0_105, %c0_106] : memref<48x1x32x128xi8, #tpu.memory_space<vmem>>, vector<1x1x32x128xi8>
    %316 = vector.shape_cast %315 : vector<1x1x32x128xi8> to vector<32x128xi8>
    %317 = arith.sitofp %316 : vector<32x128xi8> to vector<32x128xf32>
    %318 = arith.mulf %307, %317 : vector<32x128xf32>
    %319 = arith.addf %297, %318 : vector<32x128xf32>
    %c43 = arith.constant 43 : index
    %320 = arith.index_cast %c0_i32 : i32 to index
    %c0_107 = arith.constant 0 : index
    %c0_108 = arith.constant 0 : index
    %321 = vector.load %arg2[%c43, %320, %c0_107, %c0_108] : memref<48x1x32x128xi8, #tpu.memory_space<vmem>>, vector<1x1x32x128xi8>
    %322 = vector.shape_cast %321 : vector<1x1x32x128xi8> to vector<32x128xi8>
    %323 = arith.sitofp %322 : vector<32x128xi8> to vector<32x128xf32>
    %324 = arith.mulf %307, %323 : vector<32x128xf32>
    %325 = arith.addf %303, %324 : vector<32x128xf32>
    %326 = arith.minimumf %19, %7 : vector<32x128xf32>
    %327 = arith.subf %326, %3 : vector<32x128xf32>
    %cst_109 = arith.constant 0.000000e+00 : f32
    %328 = vector.broadcast %cst_109 : f32 to vector<32x128xf32>
    %329 = arith.maximumf %327, %328 : vector<32x128xf32>
    %c7 = arith.constant 7 : index
    %330 = arith.index_cast %c0_i32 : i32 to index
    %c0_110 = arith.constant 0 : index
    %c0_111 = arith.constant 0 : index
    %331 = vector.load %arg2[%c7, %330, %c0_110, %c0_111] : memref<48x1x32x128xi8, #tpu.memory_space<vmem>>, vector<1x1x32x128xi8>
    %332 = vector.shape_cast %331 : vector<1x1x32x128xi8> to vector<32x128xi8>
    %333 = arith.sitofp %332 : vector<32x128xi8> to vector<32x128xf32>
    %334 = arith.mulf %329, %333 : vector<32x128xf32>
    %335 = arith.addf %313, %334 : vector<32x128xf32>
    %c23 = arith.constant 23 : index
    %336 = arith.index_cast %c0_i32 : i32 to index
    %c0_112 = arith.constant 0 : index
    %c0_113 = arith.constant 0 : index
    %337 = vector.load %arg2[%c23, %336, %c0_112, %c0_113] : memref<48x1x32x128xi8, #tpu.memory_space<vmem>>, vector<1x1x32x128xi8>
    %338 = vector.shape_cast %337 : vector<1x1x32x128xi8> to vector<32x128xi8>
    %339 = arith.sitofp %338 : vector<32x128xi8> to vector<32x128xf32>
    %340 = arith.mulf %329, %339 : vector<32x128xf32>
    %341 = arith.addf %319, %340 : vector<32x128xf32>
    %c39 = arith.constant 39 : index
    %342 = arith.index_cast %c0_i32 : i32 to index
    %c0_114 = arith.constant 0 : index
    %c0_115 = arith.constant 0 : index
    %343 = vector.load %arg2[%c39, %342, %c0_114, %c0_115] : memref<48x1x32x128xi8, #tpu.memory_space<vmem>>, vector<1x1x32x128xi8>
    %344 = vector.shape_cast %343 : vector<1x1x32x128xi8> to vector<32x128xi8>
    %345 = arith.sitofp %344 : vector<32x128xi8> to vector<32x128xf32>
    %346 = arith.mulf %329, %345 : vector<32x128xf32>
    %347 = arith.addf %325, %346 : vector<32x128xf32>
    %348 = arith.minimumf %18, %19 : vector<32x128xf32>
    %c15 = arith.constant 15 : index
    %349 = arith.index_cast %c0_i32 : i32 to index
    %c0_116 = arith.constant 0 : index
    %c0_117 = arith.constant 0 : index
    %350 = vector.load %arg2[%c15, %349, %c0_116, %c0_117] : memref<48x1x32x128xi8, #tpu.memory_space<vmem>>, vector<1x1x32x128xi8>
    %351 = vector.shape_cast %350 : vector<1x1x32x128xi8> to vector<32x128xi8>
    %352 = arith.sitofp %351 : vector<32x128xi8> to vector<32x128xf32>
    %353 = arith.mulf %348, %352 : vector<32x128xf32>
    %354 = arith.addf %335, %353 : vector<32x128xf32>
    %c31 = arith.constant 31 : index
    %355 = arith.index_cast %c0_i32 : i32 to index
    %c0_118 = arith.constant 0 : index
    %c0_119 = arith.constant 0 : index
    %356 = vector.load %arg2[%c31, %355, %c0_118, %c0_119] : memref<48x1x32x128xi8, #tpu.memory_space<vmem>>, vector<1x1x32x128xi8>
    %357 = vector.shape_cast %356 : vector<1x1x32x128xi8> to vector<32x128xi8>
    %358 = arith.sitofp %357 : vector<32x128xi8> to vector<32x128xf32>
    %359 = arith.mulf %348, %358 : vector<32x128xf32>
    %360 = arith.addf %341, %359 : vector<32x128xf32>
    %c47 = arith.constant 47 : index
    %361 = arith.index_cast %c0_i32 : i32 to index
    %c0_120 = arith.constant 0 : index
    %c0_121 = arith.constant 0 : index
    %362 = vector.load %arg2[%c47, %361, %c0_120, %c0_121] : memref<48x1x32x128xi8, #tpu.memory_space<vmem>>, vector<1x1x32x128xi8>
    %363 = vector.shape_cast %362 : vector<1x1x32x128xi8> to vector<32x128xi8>
    %364 = arith.sitofp %363 : vector<32x128xi8> to vector<32x128xf32>
    %365 = arith.mulf %348, %364 : vector<32x128xf32>
    %366 = arith.addf %347, %365 : vector<32x128xf32>
    %cst_122 = arith.constant 6.250000e-02 : f32
    %367 = vector.broadcast %cst_122 : f32 to vector<32x128xf32>
    %368 = arith.mulf %354, %367 : vector<32x128xf32>
    %c0_123 = arith.constant 0 : index
    %369 = arith.index_cast %c0_i32 : i32 to index
    %c0_124 = arith.constant 0 : index
    %c0_125 = arith.constant 0 : index
    %370 = vector.load %arg3[%c0_123, %369, %c0_124, %c0_125] : memref<3x1x32x128xf32, #tpu.memory_space<vmem>>, vector<1x1x32x128xf32>
    %371 = vector.shape_cast %370 : vector<1x1x32x128xf32> to vector<32x128xf32>
    %372 = vector.shape_cast %368 : vector<32x128xf32> to vector<1x1x32x128xf32>
    tpu.vector_store %arg3[%c0_123, %369, %c0_124, %c0_125], %372 {strides = array<i32>} : memref<3x1x32x128xf32, #tpu.memory_space<vmem>>, vector<1x1x32x128xf32>,
    %cst_126 = arith.constant 6.250000e-02 : f32
    %373 = vector.broadcast %cst_126 : f32 to vector<32x128xf32>
    %374 = arith.mulf %360, %373 : vector<32x128xf32>
    %c1_127 = arith.constant 1 : index
    %375 = arith.index_cast %c0_i32 : i32 to index
    %c0_128 = arith.constant 0 : index
    %c0_129 = arith.constant 0 : index
    %376 = vector.load %arg3[%c1_127, %375, %c0_128, %c0_129] : memref<3x1x32x128xf32, #tpu.memory_space<vmem>>, vector<1x1x32x128xf32>
    %377 = vector.shape_cast %376 : vector<1x1x32x128xf32> to vector<32x128xf32>
    %378 = vector.shape_cast %374 : vector<32x128xf32> to vector<1x1x32x128xf32>
    tpu.vector_store %arg3[%c1_127, %375, %c0_128, %c0_129], %378 {strides = array<i32>} : memref<3x1x32x128xf32, #tpu.memory_space<vmem>>, vector<1x1x32x128xf32>,
    %cst_130 = arith.constant 6.250000e-02 : f32
    %379 = vector.broadcast %cst_130 : f32 to vector<32x128xf32>
    %380 = arith.mulf %366, %379 : vector<32x128xf32>
    %c2_131 = arith.constant 2 : index
    %381 = arith.index_cast %c0_i32 : i32 to index
    %c0_132 = arith.constant 0 : index
    %c0_133 = arith.constant 0 : index
    %382 = vector.load %arg3[%c2_131, %381, %c0_132, %c0_133] : memref<3x1x32x128xf32, #tpu.memory_space<vmem>>, vector<1x1x32x128xf32>
    %383 = vector.shape_cast %382 : vector<1x1x32x128xf32> to vector<32x128xf32>
    %384 = vector.shape_cast %380 : vector<32x128xf32> to vector<1x1x32x128xf32>
    tpu.vector_store %arg3[%c2_131, %381, %c0_132, %c0_133], %384 {strides = array<i32>} : memref<3x1x32x128xf32, #tpu.memory_space<vmem>>, vector<1x1x32x128xf32>,
    %c1_i32 = arith.constant 1 : i32
    return
  }
  func.func @transform_0(%arg0: i32) -> (i32, i32, i32, i32) {
    %c0_i32 = arith.constant 0 : i32
    %c0_i32_0 = arith.constant 0 : i32
    %c0_i32_1 = arith.constant 0 : i32
    %c0_i32_2 = arith.constant 0 : i32
    return %c0_i32, %arg0, %c0_i32_0, %c0_i32_1 : i32, i32, i32, i32
  }
  func.func @transform_1(%arg0: i32) -> (i32, i32, i32, i32) {
    %c0_i32 = arith.constant 0 : i32
    %c0_i32_0 = arith.constant 0 : i32
    %c0_i32_1 = arith.constant 0 : i32
    %c0_i32_2 = arith.constant 0 : i32
    return %c0_i32, %arg0, %c0_i32_0, %c0_i32_1 : i32, i32, i32, i32
  }
  func.func @transform_2(%arg0: i32) -> (i32, i32, i32, i32) {
    %c0_i32 = arith.constant 0 : i32
    %c0_i32_0 = arith.constant 0 : i32
    %c0_i32_1 = arith.constant 0 : i32
    %c0_i32_2 = arith.constant 0 : i32
    return %c0_i32, %arg0, %c0_i32_0, %c0_i32_1 : i32, i32, i32, i32
  }
}

</mosaic_0001>

<llo_original>
// kernel: tpu_custom_call.1
$region0: #{tpu_custom_call.1}
  #allocation0 [shape = 'u32[]', space=smem, size = 0x4, offset = 0x4, fixed_abs, tag = 'smem constant byte address 0x4 - core index']
  #allocation1 [shape = 'u32[72,128]{1,0:T(1,128)}', space=vmem, size = 0x9000, scoped, tag = 'internal scratch']
  %s0 = inlined_call_operand.hbm [shape: bf16[4,1,32,128], index: 0, kind: input, shape index: {}]
  %s1 = inlined_call_operand.hbm [shape: s8[48,1,32,128], index: 1, kind: input, shape index: {}]
  %s2 = inlined_call_operand.hbm [shape: f32[3,1,32,128], index: 2, kind: output, shape index: {}]
  %s3 = sld [smem:[#allocation0]]
  $region26: #{tpu_custom_call.1} parent=0
    _
  %s5 = ssub.s32 1, %s3
  %s6 = scalar_select 0, %s5, %s3
  $region1: #{tpu_custom_call.1} parent=0
    #allocation2 [shape = 'u8[32768]{0}', space=vmem, size = 0x8000, scoped, tag = 'input window, operand 0, single buffered']
    #allocation3 [shape = 's32[1]{0}', space=sflag, size = 0x4, scoped, tag = 'scoped memory for tpu_custom_call.1']
    #allocation4 [shape = 's32[1]{0}', space=sflag, size = 0x4, scoped, tag = 'scoped memory for tpu_custom_call.1']
    #allocation5 [shape = 'u8[196608]{0}', space=vmem, size = 0x30000, scoped, tag = 'input window, operand 1, single buffered']
    #allocation6 [shape = 's32[1]{0}', space=sflag, size = 0x4, scoped, tag = 'scoped memory for tpu_custom_call.1']
    #allocation7 [shape = 'u8[49152]{0}', space=vmem, size = 0xc000, scoped, tag = 'output window, operand 0, single buffered']
    %7 = vsyncpa [#allocation3], 0
    %8 = vsyncpa [#allocation6], 0
    %9 = vsyncpa [#allocation4], 0
    // Predicated region
    $region2: #{tpu_custom_call.1} parent=1 // pred_check
      _
    $region3: #{tpu_custom_call.1} parent=1 // pred_check_branch
      %11 = sbr.rel (0) target = $region5
    $region4: #{tpu_custom_call.1} parent=1 // pred_region
      %13 = vsyncadd [#allocation3], 0
      %s14 = sshll.u32 %s0, 4
      %s15 = int_to_ptr.hbm [resolvable:$true] %s14
      %s16 = sshll.u32 [#allocation2], 4
      %s17 = int_to_ptr.vmem [resolvable:$true] %s16
      %22 = dma.hbm_to_vmem [thread:$0]  %s15, 1024, %s17, [#allocation3], 64, 64, 4
    $region5: #{tpu_custom_call.1} parent=1 // pred_fallthru
      _
    // Predicated region
    $region6: #{tpu_custom_call.1} parent=1 // pred_check
      _
    $region7: #{tpu_custom_call.1} parent=1 // pred_check_branch
      %24 = sbr.rel (0) target = $region9
    $region8: #{tpu_custom_call.1} parent=1 // pred_region
      %26 = vsyncadd [#allocation6], 0
      %s27 = sshll.u32 %s1, 4
      %s28 = int_to_ptr.hbm [resolvable:$true] %s27
      %s29 = sshll.u32 [#allocation5], 4
      %s30 = int_to_ptr.vmem [resolvable:$true] %s29
      %35 = dma.hbm_to_vmem [thread:$0]  %s28, 6144, %s30, [#allocation6], 128, 128, 8
    $region9: #{tpu_custom_call.1} parent=1 // pred_fallthru
      _
    // Predicated region
    $region10: #{tpu_custom_call.1} parent=1 // pred_check
      _
    $region11: #{tpu_custom_call.1} parent=1 // pred_check_branch
      %37 = sbr.rel (0) target = $region13
    $region12: #{tpu_custom_call.1} parent=1 // pred_region
      %39 = dma.done [#allocation3], 1024
    $region13: #{tpu_custom_call.1} parent=1 // pred_fallthru
      _
    // Predicated region
    $region14: #{tpu_custom_call.1} parent=1 // pred_check
      _
    $region15: #{tpu_custom_call.1} parent=1 // pred_check_branch
      %41 = sbr.rel (0) target = $region17
    $region16: #{tpu_custom_call.1} parent=1 // pred_region
      %43 = dma.done [#allocation6], 6144
    $region17: #{tpu_custom_call.1} parent=1 // pred_fallthru
      _
    %v44 = vld [vmem:[#allocation2] sm:$0xf]
    %v45 = vld [vmem:[#allocation2 + $0x4] sm:$0xf]
    %v46 = vld [vmem:[#allocation2 + $0x8] sm:$0xf]
    %v47 = vld [vmem:[#allocation2 + $0xc] sm:$0xf]
    %v48 = vunpack.c.l.bf16 %v44
    %v49 = vunpack.c.l.bf16 %v45
    %v50 = vunpack.c.l.bf16 %v46
    %v51 = vunpack.c.l.bf16 %v47
    %s52 = scalar_lea.vmem [#allocation2], 16
    %v53 = vld [vmem:[%s52] sm:$0xf]
    %v54 = vld [vmem:[%s52 + $0x4] sm:$0xf]
    %v55 = vld [vmem:[%s52 + $0x8] sm:$0xf]
    %v56 = vld [vmem:[%s52 + $0xc] sm:$0xf]
    %v57 = vunpack.c.l.bf16 %v53
    %v58 = vunpack.c.l.bf16 %v54
    %v59 = vunpack.c.l.bf16 %v55
    %v60 = vunpack.c.l.bf16 %v56
    %s61 = scalar_lea.vmem [#allocation2], 32
    %v62 = vld [vmem:[%s61] sm:$0xf]
    %v63 = vld [vmem:[%s61 + $0x4] sm:$0xf]
    %v64 = vld [vmem:[%s61 + $0x8] sm:$0xf]
    %v65 = vld [vmem:[%s61 + $0xc] sm:$0xf]
    %v66 = vunpack.c.l.bf16 %v62
    %v67 = vunpack.c.l.bf16 %v63
    %v68 = vunpack.c.l.bf16 %v64
    %v69 = vunpack.c.l.bf16 %v65
    %s70 = scalar_lea.vmem [#allocation2], 48
    %v71 = vld [vmem:[%s70] sm:$0xf]
    %v72 = vld [vmem:[%s70 + $0x4] sm:$0xf]
    %v73 = vld [vmem:[%s70 + $0x8] sm:$0xf]
    %v74 = vld [vmem:[%s70 + $0xc] sm:$0xf]
    %v75 = vunpack.c.l.bf16 %v71
    %v76 = vunpack.c.l.bf16 %v72
    %v77 = vunpack.c.l.bf16 %v73
    %v78 = vunpack.c.l.bf16 %v74
    %v79 = vmax.f32 %v48, %v57
    %v80 = vmax.f32 %v49, %v58
    %v81 = vmax.f32 %v50, %v59
    %v82 = vmax.f32 %v51, %v60
    %v83 = vmax.f32 %v66, %v75
    %v84 = vmax.f32 %v67, %v76
    %v85 = vmax.f32 %v68, %v77
    %v86 = vmax.f32 %v69, %v78
    %v87 = vmin.f32 %v48, %v57
    %v88 = vmin.f32 %v49, %v58
    %v89 = vmin.f32 %v50, %v59
    %v90 = vmin.f32 %v51, %v60
    %v91 = vmin.f32 %v66, %v75
    %v92 = vmin.f32 %v67, %v76
    %v93 = vmin.f32 %v68, %v77
    %v94 = vmin.f32 %v69, %v78
    %v95 = vmax.f32 %v79, %v83
    %v96 = vmax.f32 %v80, %v84
    %v97 = vmax.f32 %v81, %v85
    %v98 = vmax.f32 %v82, %v86
    %v99 = vsub.f32 16.0, %v95
    %v100 = vsub.f32 16.0, %v96
    %v101 = vsub.f32 16.0, %v97
    %v102 = vsub.f32 16.0, %v98
    %v103 = vld [vmem:[#allocation5] sm:$0xff]
    %v104 = vunpack.c.0.s8 %v103
    %v105 = vunpack.c.1.s8 %v103
    %v106 = vunpack.c.2.s8 %v103
    %v107 = vunpack.c.3.s8 %v103
    %v108 = vcvt.s32.f32 %v104
    %v109 = vcvt.s32.f32 %v105
    %v110 = vcvt.s32.f32 %v106
    %v111 = vcvt.s32.f32 %v107
    %v112 = vmul.f32 %v99, %v108
    %v113 = vmul.f32 %v100, %v109
    %v114 = vmul.f32 %v101, %v110
    %v115 = vmul.f32 %v102, %v111
    %s116 = scalar_lea.vmem [#allocation5], 128
    %v117 = vld [vmem:[%s116] sm:$0xff]
    %v118 = vunpack.c.0.s8 %v117
    %v119 = vunpack.c.1.s8 %v117
    %v120 = vunpack.c.2.s8 %v117
    %v121 = vunpack.c.3.s8 %v117
    %v122 = vcvt.s32.f32 %v118
    %v123 = vcvt.s32.f32 %v119
    %v124 = vcvt.s32.f32 %v120
    %v125 = vcvt.s32.f32 %v121
    %v126 = vmul.f32 %v99, %v122
    %v127 = vmul.f32 %v100, %v123
    %v128 = vmul.f32 %v101, %v124
    %v129 = vmul.f32 %v102, %v125
    %s130 = scalar_lea.vmem [#allocation5], 256
    %v131 = vld [vmem:[%s130] sm:$0xff]
    %v132 = vunpack.c.0.s8 %v131
    %v133 = vunpack.c.1.s8 %v131
    %v134 = vunpack.c.2.s8 %v131
    %v135 = vunpack.c.3.s8 %v131
    %v136 = vcvt.s32.f32 %v132
    %v137 = vcvt.s32.f32 %v133
    %v138 = vcvt.s32.f32 %v134
    %v139 = vcvt.s32.f32 %v135
    %v140 = vmul.f32 %v99, %v136
    %v141 = vmul.f32 %v100, %v137
    %v142 = vmul.f32 %v101, %v138
    %v143 = vmul.f32 %v102, %v139
    %v144 = vmax.f32 %v83, %v57
    %v145 = vmax.f32 %v84, %v58
    %v146 = vmax.f32 %v85, %v59
    %v147 = vmax.f32 %v86, %v60
    %v148 = vsub.f32 %v48, %v144
    %v149 = vsub.f32 %v49, %v145
    %v150 = vsub.f32 %v50, %v146
    %v151 = vsub.f32 %v51, %v147
    %v152 = vmax.f32 %v148, 0.0
    %v153 = vmax.f32 %v149, 0.0
    %v154 = vmax.f32 %v150, 0.0
    %v155 = vmax.f32 %v151, 0.0
    %s156 = scalar_lea.vmem [#allocation5], 64
    %v157 = vld [vmem:[%s156] sm:$0xff]
    %v158 = vunpack.c.0.s8 %v157
    %v159 = vunpack.c.1.s8 %v157
    %v160 = vunpack.c.2.s8 %v157
    %v161 = vunpack.c.3.s8 %v157
    %v162 = vcvt.s32.f32 %v158
    %v163 = vcvt.s32.f32 %v159
    %v164 = vcvt.s32.f32 %v160
    %v165 = vcvt.s32.f32 %v161
    %v166 = vmul.f32 %v152, %v162
    %v167 = vmul.f32 %v153, %v163
    %v168 = vmul.f32 %v154, %v164
    %v169 = vmul.f32 %v155, %v165
    %v170 = vadd.f32 %v112, %v166
    %v171 = vadd.f32 %v113, %v167
    %v172 = vadd.f32 %v114, %v168
    %v173 = vadd.f32 %v115, %v169
    %s174 = scalar_lea.vmem [#allocation5], 192
    %v175 = vld [vmem:[%s174] sm:$0xff]
    %v176 = vunpack.c.0.s8 %v175
    %v177 = vunpack.c.1.s8 %v175
    %v178 = vunpack.c.2.s8 %v175
    %v179 = vunpack.c.3.s8 %v175
    %v180 = vcvt.s32.f32 %v176
    %v181 = vcvt.s32.f32 %v177
    %v182 = vcvt.s32.f32 %v178
    %v183 = vcvt.s32.f32 %v179
    %v184 = vmul.f32 %v152, %v180
    %v185 = vmul.f32 %v153, %v181
    %v186 = vmul.f32 %v154, %v182
    %v187 = vmul.f32 %v155, %v183
    %v188 = vadd.f32 %v126, %v184
    %v189 = vadd.f32 %v127, %v185
    %v190 = vadd.f32 %v128, %v186
    %v191 = vadd.f32 %v129, %v187
    %s192 = scalar_lea.vmem [#allocation5], 320
    %v193 = vld [vmem:[%s192] sm:$0xff]
    %v194 = vunpack.c.0.s8 %v193
    %v195 = vunpack.c.1.s8 %v193
    %v196 = vunpack.c.2.s8 %v193
    %v197 = vunpack.c.3.s8 %v193
    %v198 = vcvt.s32.f32 %v194
    %v199 = vcvt.s32.f32 %v195
    %v200 = vcvt.s32.f32 %v196
    %v201 = vcvt.s32.f32 %v197
    %v202 = vmul.f32 %v152, %v198
    %v203 = vmul.f32 %v153, %v199
    %v204 = vmul.f32 %v154, %v200
    %v205 = vmul.f32 %v155, %v201
    %v206 = vadd.f32 %v140, %v202
    %v207 = vadd.f32 %v141, %v203
    %v208 = vadd.f32 %v142, %v204
    %v209 = vadd.f32 %v143, %v205
    %v210 = vmax.f32 %v83, %v48
    %v211 = vmax.f32 %v84, %v49
    %v212 = vmax.f32 %v85, %v50
    %v213 = vmax.f32 %v86, %v51
    %v214 = vsub.f32 %v57, %v210
    %v215 = vsub.f32 %v58, %v211
    %v216 = vsub.f32 %v59, %v212
    %v217 = vsub.f32 %v60, %v213
    %v218 = vmax.f32 %v214, 0.0
    %v219 = vmax.f32 %v215, 0.0
    %v220 = vmax.f32 %v216, 0.0
    %v221 = vmax.f32 %v217, 0.0
    %s222 = scalar_lea.vmem [#allocation5], 32
    %v223 = vld [vmem:[%s222] sm:$0xff]
    %v224 = vunpack.c.0.s8 %v223
    %v225 = vunpack.c.1.s8 %v223
    %v226 = vunpack.c.2.s8 %v223
    %v227 = vunpack.c.3.s8 %v223
    %v228 = vcvt.s32.f32 %v224
    %v229 = vcvt.s32.f32 %v225
    %v230 = vcvt.s32.f32 %v226
    %v231 = vcvt.s32.f32 %v227
    %v232 = vmul.f32 %v218, %v228
    %v233 = vmul.f32 %v219, %v229
    %v234 = vmul.f32 %v220, %v230
    %v235 = vmul.f32 %v221, %v231
    %v236 = vadd.f32 %v170, %v232
    %v237 = vadd.f32 %v171, %v233
    %v238 = vadd.f32 %v172, %v234
    %v239 = vadd.f32 %v173, %v235
    %s240 = scalar_lea.vmem [#allocation5], 160
    %v241 = vld [vmem:[%s240] sm:$0xff]
    %v242 = vunpack.c.0.s8 %v241
    %v243 = vunpack.c.1.s8 %v241
    %v244 = vunpack.c.2.s8 %v241
    %v245 = vunpack.c.3.s8 %v241
    %v246 = vcvt.s32.f32 %v242
    %v247 = vcvt.s32.f32 %v243
    %v248 = vcvt.s32.f32 %v244
    %v249 = vcvt.s32.f32 %v245
    %v250 = vmul.f32 %v218, %v246
    %v251 = vmul.f32 %v219, %v247
    %v252 = vmul.f32 %v220, %v248
    %v253 = vmul.f32 %v221, %v249
    %v254 = vadd.f32 %v188, %v250
    %v255 = vadd.f32 %v189, %v251
    %v256 = vadd.f32 %v190, %v252
    %v257 = vadd.f32 %v191, %v253
    %s258 = scalar_lea.vmem [#allocation5], 288
    %v259 = vld [vmem:[%s258] sm:$0xff]
    %v260 = vunpack.c.0.s8 %v259
    %v261 = vunpack.c.1.s8 %v259
    %v262 = vunpack.c.2.s8 %v259
    %v263 = vunpack.c.3.s8 %v259
    %v264 = vcvt.s32.f32 %v260
    %v265 = vcvt.s32.f32 %v261
    %v266 = vcvt.s32.f32 %v262
    %v267 = vcvt.s32.f32 %v263
    %v268 = vmul.f32 %v218, %v264
    %v269 = vmul.f32 %v219, %v265
    %v270 = vmul.f32 %v220, %v266
    %v271 = vmul.f32 %v221, %v267
    %v272 = vadd.f32 %v206, %v268
    %v273 = vadd.f32 %v207, %v269
    %v274 = vadd.f32 %v208, %v270
    %v275 = vadd.f32 %v209, %v271
    %v276 = vmax.f32 %v79, %v75
    %v277 = vmax.f32 %v80, %v76
    %v278 = vmax.f32 %v81, %v77
    %v279 = vmax.f32 %v82, %v78
    %v280 = vsub.f32 %v66, %v276
    %v281 = vsub.f32 %v67, %v277
    %v282 = vsub.f32 %v68, %v278
    %v283 = vsub.f32 %v69, %v279
    %v284 = vmax.f32 %v280, 0.0
    %v285 = vmax.f32 %v281, 0.0
    %v286 = vmax.f32 %v282, 0.0
    %v287 = vmax.f32 %v283, 0.0
    %s288 = scalar_lea.vmem [#allocation5], 16
    %v289 = vld [vmem:[%s288] sm:$0xff]
    %v290 = vunpack.c.0.s8 %v289
    %v291 = vunpack.c.1.s8 %v289
    %v292 = vunpack.c.2.s8 %v289
    %v293 = vunpack.c.3.s8 %v289
    %v294 = vcvt.s32.f32 %v290
    %v295 = vcvt.s32.f32 %v291
    %v296 = vcvt.s32.f32 %v292
    %v297 = vcvt.s32.f32 %v293
    %v298 = vmul.f32 %v284, %v294
    %v299 = vmul.f32 %v285, %v295
    %v300 = vmul.f32 %v286, %v296
    %v301 = vmul.f32 %v287, %v297
    %v302 = vadd.f32 %v236, %v298
    %v303 = vadd.f32 %v237, %v299
    %v304 = vadd.f32 %v238, %v300
    %v305 = vadd.f32 %v239, %v301
    %s306 = scalar_lea.vmem [#allocation5], 144
    %v307 = vld [vmem:[%s306] sm:$0xff]
    %v308 = vunpack.c.0.s8 %v307
    %v309 = vunpack.c.1.s8 %v307
    %v310 = vunpack.c.2.s8 %v307
    %v311 = vunpack.c.3.s8 %v307
    %v312 = vcvt.s32.f32 %v308
    %v313 = vcvt.s32.f32 %v309
    %v314 = vcvt.s32.f32 %v310
    %v315 = vcvt.s32.f32 %v311
    %v316 = vmul.f32 %v284, %v312
    %v317 = vmul.f32 %v285, %v313
    %v318 = vmul.f32 %v286, %v314
    %v319 = vmul.f32 %v287, %v315
    %v320 = vadd.f32 %v254, %v316
    %v321 = vadd.f32 %v255, %v317
    %v322 = vadd.f32 %v256, %v318
    %v323 = vadd.f32 %v257, %v319
    %s324 = scalar_lea.vmem [#allocation5], 272
    %v325 = vld [vmem:[%s324] sm:$0xff]
    %v326 = vunpack.c.0.s8 %v325
    %v327 = vunpack.c.1.s8 %v325
    %v328 = vunpack.c.2.s8 %v325
    %v329 = vunpack.c.3.s8 %v325
    %v330 = vcvt.s32.f32 %v326
    %v331 = vcvt.s32.f32 %v327
    %v332 = vcvt.s32.f32 %v328
    %v333 = vcvt.s32.f32 %v329
    %v334 = vmul.f32 %v284, %v330
    %v335 = vmul.f32 %v285, %v331
    %v336 = vmul.f32 %v286, %v332
    %v337 = vmul.f32 %v287, %v333
    %v338 = vadd.f32 %v272, %v334
    %v339 = vadd.f32 %v273, %v335
    %v340 = vadd.f32 %v274, %v336
    %v341 = vadd.f32 %v275, %v337
    %v342 = vmax.f32 %v79, %v66
    %v343 = vmax.f32 %v80, %v67
    %v344 = vmax.f32 %v81, %v68
    %v345 = vmax.f32 %v82, %v69
    %v346 = vsub.f32 %v75, %v342
    %v347 = vsub.f32 %v76, %v343
    %v348 = vsub.f32 %v77, %v344
    %v349 = vsub.f32 %v78, %v345
    %v350 = vmax.f32 %v346, 0.0
    %v351 = vmax.f32 %v347, 0.0
    %v352 = vmax.f32 %v348, 0.0
    %v353 = vmax.f32 %v349, 0.0
    %s354 = scalar_lea.vmem [#allocation5], 8
    %v355 = vld [vmem:[%s354] sm:$0xff]
    %v356 = vunpack.c.0.s8 %v355
    %v357 = vunpack.c.1.s8 %v355
    %v358 = vunpack.c.2.s8 %v355
    %v359 = vunpack.c.3.s8 %v355
    %v360 = vcvt.s32.f32 %v356
    %v361 = vcvt.s32.f32 %v357
    %v362 = vcvt.s32.f32 %v358
    %v363 = vcvt.s32.f32 %v359
    %v364 = vmul.f32 %v350, %v360
    %v365 = vmul.f32 %v351, %v361
    %v366 = vmul.f32 %v352, %v362
    %v367 = vmul.f32 %v353, %v363
    %v368 = vadd.f32 %v302, %v364
    %v369 = vadd.f32 %v303, %v365
    %v370 = vadd.f32 %v304, %v366
    %v371 = vadd.f32 %v305, %v367
    %s372 = scalar_lea.vmem [#allocation5], 136
    %v373 = vld [vmem:[%s372] sm:$0xff]
    %v374 = vunpack.c.0.s8 %v373
    %v375 = vunpack.c.1.s8 %v373
    %v376 = vunpack.c.2.s8 %v373
    %v377 = vunpack.c.3.s8 %v373
    %v378 = vcvt.s32.f32 %v374
    %v379 = vcvt.s32.f32 %v375
    %v380 = vcvt.s32.f32 %v376
    %v381 = vcvt.s32.f32 %v377
    %v382 = vmul.f32 %v350, %v378
    %v383 = vmul.f32 %v351, %v379
    %v384 = vmul.f32 %v352, %v380
    %v385 = vmul.f32 %v353, %v381
    %v386 = vadd.f32 %v320, %v382
    %v387 = vadd.f32 %v321, %v383
    %v388 = vadd.f32 %v322, %v384
    %v389 = vadd.f32 %v323, %v385
    %s390 = scalar_lea.vmem [#allocation5], 264
    %v391 = vld [vmem:[%s390] sm:$0xff]
    %v392 = vunpack.c.0.s8 %v391
    %v393 = vunpack.c.1.s8 %v391
    %v394 = vunpack.c.2.s8 %v391
    %v395 = vunpack.c.3.s8 %v391
    %v396 = vcvt.s32.f32 %v392
    %v397 = vcvt.s32.f32 %v393
    %v398 = vcvt.s32.f32 %v394
    %v399 = vcvt.s32.f32 %v395
    %v400 = vmul.f32 %v350, %v396
    %v401 = vmul.f32 %v351, %v397
    %v402 = vmul.f32 %v352, %v398
    %v403 = vmul.f32 %v353, %v399
    %v404 = vadd.f32 %v338, %v400
    %v405 = vadd.f32 %v339, %v401
    %v406 = vadd.f32 %v340, %v402
    %v407 = vadd.f32 %v341, %v403
    %v408 = vsub.f32 %v87, %v83
    %v409 = vsub.f32 %v88, %v84
    %v410 = vsub.f32 %v89, %v85
    %v411 = vsub.f32 %v90, %v86
    %v412 = vmax.f32 %v408, 0.0
    %v413 = vmax.f32 %v409, 0.0
    %v414 = vmax.f32 %v410, 0.0
    %v415 = vmax.f32 %v411, 0.0
    %s416 = scalar_lea.vmem [#allocation5], 96
    %v417 = vld [vmem:[%s416] sm:$0xff]
    %v418 = vunpack.c.0.s8 %v417
    %v419 = vunpack.c.1.s8 %v417
    %v420 = vunpack.c.2.s8 %v417
    %v421 = vunpack.c.3.s8 %v417
    %v422 = vcvt.s32.f32 %v418
    %v423 = vcvt.s32.f32 %v419
    %v424 = vcvt.s32.f32 %v420
    %v425 = vcvt.s32.f32 %v421
    %v426 = vmul.f32 %v412, %v422
    %v427 = vmul.f32 %v413, %v423
    %v428 = vmul.f32 %v414, %v424
    %v429 = vmul.f32 %v415, %v425
    %v430 = vadd.f32 %v368, %v426
    %v431 = vadd.f32 %v369, %v427
    %v432 = vadd.f32 %v370, %v428
    %v433 = vadd.f32 %v371, %v429
    %s434 = scalar_lea.vmem [#allocation5], 224
    %v435 = vld [vmem:[%s434] sm:$0xff]
    %v436 = vunpack.c.0.s8 %v435
    %v437 = vunpack.c.1.s8 %v435
    %v438 = vunpack.c.2.s8 %v435
    %v439 = vunpack.c.3.s8 %v435
    %v440 = vcvt.s32.f32 %v436
    %v441 = vcvt.s32.f32 %v437
    %v442 = vcvt.s32.f32 %v438
    %v443 = vcvt.s32.f32 %v439
    %v444 = vmul.f32 %v412, %v440
    %v445 = vmul.f32 %v413, %v441
    %v446 = vmul.f32 %v414, %v442
    %v447 = vmul.f32 %v415, %v443
    %v448 = vadd.f32 %v386, %v444
    %v449 = vadd.f32 %v387, %v445
    %v450 = vadd.f32 %v388, %v446
    %v451 = vadd.f32 %v389, %v447
    %s452 = scalar_lea.vmem [#allocation5], 352
    %v453 = vld [vmem:[%s452] sm:$0xff]
    %v454 = vunpack.c.0.s8 %v453
    %v455 = vunpack.c.1.s8 %v453
    %v456 = vunpack.c.2.s8 %v453
    %v457 = vunpack.c.3.s8 %v453
    %v458 = vcvt.s32.f32 %v454
    %v459 = vcvt.s32.f32 %v455
    %v460 = vcvt.s32.f32 %v456
    %v461 = vcvt.s32.f32 %v457
    %v462 = vmul.f32 %v412, %v458
    %v463 = vmul.f32 %v413, %v459
    %v464 = vmul.f32 %v414, %v460
    %v465 = vmul.f32 %v415, %v461
    %v466 = vadd.f32 %v404, %v462
    %v467 = vadd.f32 %v405, %v463
    %v468 = vadd.f32 %v406, %v464
    %v469 = vadd.f32 %v407, %v465
    %v470 = vmin.f32 %v48, %v66
    %v471 = vmin.f32 %v49, %v67
    %v472 = vmin.f32 %v50, %v68
    %v473 = vmin.f32 %v51, %v69
    %v474 = vmax.f32 %v57, %v75
    %v475 = vmax.f32 %v58, %v76
    %v476 = vmax.f32 %v59, %v77
    %v477 = vmax.f32 %v60, %v78
    %v478 = vsub.f32 %v470, %v474
    %v479 = vsub.f32 %v471, %v475
    %v480 = vsub.f32 %v472, %v476
    %v481 = vsub.f32 %v473, %v477
    %v482 = vmax.f32 %v478, 0.0
    %v483 = vmax.f32 %v479, 0.0
    %v484 = vmax.f32 %v480, 0.0
    %v485 = vmax.f32 %v481, 0.0
    %s486 = scalar_lea.vmem [#allocation5], 80
    %v487 = vld [vmem:[%s486] sm:$0xff]
    %v488 = vunpack.c.0.s8 %v487
    %v489 = vunpack.c.1.s8 %v487
    %v490 = vunpack.c.2.s8 %v487
    %v491 = vunpack.c.3.s8 %v487
    %v492 = vcvt.s32.f32 %v488
    %v493 = vcvt.s32.f32 %v489
    %v494 = vcvt.s32.f32 %v490
    %v495 = vcvt.s32.f32 %v491
    %v496 = vmul.f32 %v482, %v492
    %v497 = vmul.f32 %v483, %v493
    %v498 = vmul.f32 %v484, %v494
    %v499 = vmul.f32 %v485, %v495
    %v500 = vadd.f32 %v430, %v496
    %v501 = vadd.f32 %v431, %v497
    %v502 = vadd.f32 %v432, %v498
    %v503 = vadd.f32 %v433, %v499
    %s504 = scalar_lea.vmem [#allocation5], 208
    %v505 = vld [vmem:[%s504] sm:$0xff]
    %v506 = vunpack.c.0.s8 %v505
    %v507 = vunpack.c.1.s8 %v505
    %v508 = vunpack.c.2.s8 %v505
    %v509 = vunpack.c.3.s8 %v505
    %v510 = vcvt.s32.f32 %v506
    %v511 = vcvt.s32.f32 %v507
    %v512 = vcvt.s32.f32 %v508
    %v513 = vcvt.s32.f32 %v509
    %v514 = vmul.f32 %v482, %v510
    %v515 = vmul.f32 %v483, %v511
    %v516 = vmul.f32 %v484, %v512
    %v517 = vmul.f32 %v485, %v513
    %v518 = vadd.f32 %v448, %v514
    %v519 = vadd.f32 %v449, %v515
    %v520 = vadd.f32 %v450, %v516
    %v521 = vadd.f32 %v451, %v517
    %s522 = scalar_lea.vmem [#allocation5], 336
    %v523 = vld [vmem:[%s522] sm:$0xff]
    %v524 = vunpack.c.0.s8 %v523
    %v525 = vunpack.c.1.s8 %v523
    %v526 = vunpack.c.2.s8 %v523
    %v527 = vunpack.c.3.s8 %v523
    %v528 = vcvt.s32.f32 %v524
    %v529 = vcvt.s32.f32 %v525
    %v530 = vcvt.s32.f32 %v526
    %v531 = vcvt.s32.f32 %v527
    %v532 = vmul.f32 %v482, %v528
    %v533 = vmul.f32 %v483, %v529
    %v534 = vmul.f32 %v484, %v530
    %v535 = vmul.f32 %v485, %v531
    %v536 = vadd.f32 %v466, %v532
    %v537 = vadd.f32 %v467, %v533
    %v538 = vadd.f32 %v468, %v534
    %v539 = vadd.f32 %v469, %v535
    %v540 = vmin.f32 %v48, %v75
    %v541 = vmin.f32 %v49, %v76
    %v542 = vmin.f32 %v50, %v77
    %v543 = vmin.f32 %v51, %v78
    %v544 = vmax.f32 %v57, %v66
    %v545 = vmax.f32 %v58, %v67
    %v546 = vmax.f32 %v59, %v68
    %v547 = vmax.f32 %v60, %v69
    %v548 = vsub.f32 %v540, %v544
    %v549 = vsub.f32 %v541, %v545
    %v550 = vsub.f32 %v542, %v546
    %v551 = vsub.f32 %v543, %v547
    %v552 = vmax.f32 %v548, 0.0
    %v553 = vmax.f32 %v549, 0.0
    %v554 = vmax.f32 %v550, 0.0
    %v555 = vmax.f32 %v551, 0.0
    %s556 = scalar_lea.vmem [#allocation5], 72
    %v557 = vld [vmem:[%s556] sm:$0xff]
    %v558 = vunpack.c.0.s8 %v557
    %v559 = vunpack.c.1.s8 %v557
    %v560 = vunpack.c.2.s8 %v557
    %v561 = vunpack.c.3.s8 %v557
    %v562 = vcvt.s32.f32 %v558
    %v563 = vcvt.s32.f32 %v559
    %v564 = vcvt.s32.f32 %v560
    %v565 = vcvt.s32.f32 %v561
    %v566 = vmul.f32 %v552, %v562
    %v567 = vmul.f32 %v553, %v563
    %v568 = vmul.f32 %v554, %v564
    %v569 = vmul.f32 %v555, %v565
    %v570 = vadd.f32 %v500, %v566
    %v571 = vadd.f32 %v501, %v567
    %v572 = vadd.f32 %v502, %v568
    %v573 = vadd.f32 %v503, %v569
    %s574 = scalar_lea.vmem [#allocation5], 200
    %v575 = vld [vmem:[%s574] sm:$0xff]
    %v576 = vunpack.c.0.s8 %v575
    %v577 = vunpack.c.1.s8 %v575
    %v578 = vunpack.c.2.s8 %v575
    %v579 = vunpack.c.3.s8 %v575
    %v580 = vcvt.s32.f32 %v576
    %v581 = vcvt.s32.f32 %v577
    %v582 = vcvt.s32.f32 %v578
    %v583 = vcvt.s32.f32 %v579
    %v584 = vmul.f32 %v552, %v580
    %v585 = vmul.f32 %v553, %v581
    %v586 = vmul.f32 %v554, %v582
    %v587 = vmul.f32 %v555, %v583
    %v588 = vadd.f32 %v518, %v584
    %v589 = vadd.f32 %v519, %v585
    %v590 = vadd.f32 %v520, %v586
    %v591 = vadd.f32 %v521, %v587
    %s592 = scalar_lea.vmem [#allocation5], 328
    %v593 = vld [vmem:[%s592] sm:$0xff]
    %v594 = vunpack.c.0.s8 %v593
    %v595 = vunpack.c.1.s8 %v593
    %v596 = vunpack.c.2.s8 %v593
    %v597 = vunpack.c.3.s8 %v593
    %v598 = vcvt.s32.f32 %v594
    %v599 = vcvt.s32.f32 %v595
    %v600 = vcvt.s32.f32 %v596
    %v601 = vcvt.s32.f32 %v597
    %v602 = vmul.f32 %v552, %v598
    %v603 = vmul.f32 %v553, %v599
    %v604 = vmul.f32 %v554, %v600
    %v605 = vmul.f32 %v555, %v601
    %v606 = vadd.f32 %v536, %v602
    %v607 = vadd.f32 %v537, %v603
    %v608 = vadd.f32 %v538, %v604
    %v609 = vadd.f32 %v539, %v605
    %v610 = vmin.f32 %v57, %v66
    %v611 = vmin.f32 %v58, %v67
    %v612 = vmin.f32 %v59, %v68
    %v613 = vmin.f32 %v60, %v69
    %v614 = vmax.f32 %v48, %v75
    %v615 = vmax.f32 %v49, %v76
    %v616 = vmax.f32 %v50, %v77
    %v617 = vmax.f32 %v51, %v78
    %v618 = vsub.f32 %v610, %v614
    %v619 = vsub.f32 %v611, %v615
    %v620 = vsub.f32 %v612, %v616
    %v621 = vsub.f32 %v613, %v617
    %v622 = vmax.f32 %v618, 0.0
    %v623 = vmax.f32 %v619, 0.0
    %v624 = vmax.f32 %v620, 0.0
    %v625 = vmax.f32 %v621, 0.0
    %s626 = scalar_lea.vmem [#allocation5], 48
    %v627 = vld [vmem:[%s626] sm:$0xff]
    %v628 = vunpack.c.0.s8 %v627
    %v629 = vunpack.c.1.s8 %v627
    %v630 = vunpack.c.2.s8 %v627
    %v631 = vunpack.c.3.s8 %v627
    %v632 = vcvt.s32.f32 %v628
    %v633 = vcvt.s32.f32 %v629
    %v634 = vcvt.s32.f32 %v630
    %v635 = vcvt.s32.f32 %v631
    %v636 = vmul.f32 %v622, %v632
    %v637 = vmul.f32 %v623, %v633
    %v638 = vmul.f32 %v624, %v634
    %v639 = vmul.f32 %v625, %v635
    %v640 = vadd.f32 %v570, %v636
    %v641 = vadd.f32 %v571, %v637
    %v642 = vadd.f32 %v572, %v638
    %v643 = vadd.f32 %v573, %v639
    %s644 = scalar_lea.vmem [#allocation5], 176
    %v645 = vld [vmem:[%s644] sm:$0xff]
    %v646 = vunpack.c.0.s8 %v645
    %v647 = vunpack.c.1.s8 %v645
    %v648 = vunpack.c.2.s8 %v645
    %v649 = vunpack.c.3.s8 %v645
    %v650 = vcvt.s32.f32 %v646
    %v651 = vcvt.s32.f32 %v647
    %v652 = vcvt.s32.f32 %v648
    %v653 = vcvt.s32.f32 %v649
    %v654 = vmul.f32 %v622, %v650
    %v655 = vmul.f32 %v623, %v651
    %v656 = vmul.f32 %v624, %v652
    %v657 = vmul.f32 %v625, %v653
    %v658 = vadd.f32 %v588, %v654
    %v659 = vadd.f32 %v589, %v655
    %v660 = vadd.f32 %v590, %v656
    %v661 = vadd.f32 %v591, %v657
    %s662 = scalar_lea.vmem [#allocation5], 304
    %v663 = vld [vmem:[%s662] sm:$0xff]
    %v664 = vunpack.c.0.s8 %v663
    %v665 = vunpack.c.1.s8 %v663
    %v666 = vunpack.c.2.s8 %v663
    %v667 = vunpack.c.3.s8 %v663
    %v668 = vcvt.s32.f32 %v664
    %v669 = vcvt.s32.f32 %v665
    %v670 = vcvt.s32.f32 %v666
    %v671 = vcvt.s32.f32 %v667
    %v672 = vmul.f32 %v622, %v668
    %v673 = vmul.f32 %v623, %v669
    %v674 = vmul.f32 %v624, %v670
    %v675 = vmul.f32 %v625, %v671
    %v676 = vadd.f32 %v606, %v672
    %v677 = vadd.f32 %v607, %v673
    %v678 = vadd.f32 %v608, %v674
    %v679 = vadd.f32 %v609, %v675
    %v680 = vmin.f32 %v57, %v75
    %v681 = vmin.f32 %v58, %v76
    %v682 = vmin.f32 %v59, %v77
    %v683 = vmin.f32 %v60, %v78
    %v684 = vmax.f32 %v48, %v66
    %v685 = vmax.f32 %v49, %v67
    %v686 = vmax.f32 %v50, %v68
    %v687 = vmax.f32 %v51, %v69
    %v688 = vsub.f32 %v680, %v684
    %v689 = vsub.f32 %v681, %v685
    %v690 = vsub.f32 %v682, %v686
    %v691 = vsub.f32 %v683, %v687
    %v692 = vmax.f32 %v688, 0.0
    %v693 = vmax.f32 %v689, 0.0
    %v694 = vmax.f32 %v690, 0.0
    %v695 = vmax.f32 %v691, 0.0
    %s696 = scalar_lea.vmem [#allocation5], 40
    %v697 = vld [vmem:[%s696] sm:$0xff]
    %v698 = vunpack.c.0.s8 %v697
    %v699 = vunpack.c.1.s8 %v697
    %v700 = vunpack.c.2.s8 %v697
    %v701 = vunpack.c.3.s8 %v697
    %v702 = vcvt.s32.f32 %v698
    %v703 = vcvt.s32.f32 %v699
    %v704 = vcvt.s32.f32 %v700
    %v705 = vcvt.s32.f32 %v701
    %v706 = vmul.f32 %v692, %v702
    %v707 = vmul.f32 %v693, %v703
    %v708 = vmul.f32 %v694, %v704
    %v709 = vmul.f32 %v695, %v705
    %v710 = vadd.f32 %v640, %v706
    %v711 = vadd.f32 %v641, %v707
    %v712 = vadd.f32 %v642, %v708
    %v713 = vadd.f32 %v643, %v709
    %s714 = scalar_lea.vmem [#allocation5], 168
    %v715 = vld [vmem:[%s714] sm:$0xff]
    %v716 = vunpack.c.0.s8 %v715
    %v717 = vunpack.c.1.s8 %v715
    %v718 = vunpack.c.2.s8 %v715
    %v719 = vunpack.c.3.s8 %v715
    %v720 = vcvt.s32.f32 %v716
    %v721 = vcvt.s32.f32 %v717
    %v722 = vcvt.s32.f32 %v718
    %v723 = vcvt.s32.f32 %v719
    %v724 = vmul.f32 %v692, %v720
    %v725 = vmul.f32 %v693, %v721
    %v726 = vmul.f32 %v694, %v722
    %v727 = vmul.f32 %v695, %v723
    %v728 = vadd.f32 %v658, %v724
    %v729 = vadd.f32 %v659, %v725
    %v730 = vadd.f32 %v660, %v726
    %v731 = vadd.f32 %v661, %v727
    %s732 = scalar_lea.vmem [#allocation5], 296
    %v733 = vld [vmem:[%s732] sm:$0xff]
    %v734 = vunpack.c.0.s8 %v733
    %v735 = vunpack.c.1.s8 %v733
    %v736 = vunpack.c.2.s8 %v733
    %v737 = vunpack.c.3.s8 %v733
    %v738 = vcvt.s32.f32 %v734
    %v739 = vcvt.s32.f32 %v735
    %v740 = vcvt.s32.f32 %v736
    %v741 = vcvt.s32.f32 %v737
    %v742 = vmul.f32 %v692, %v738
    %v743 = vmul.f32 %v693, %v739
    %v744 = vmul.f32 %v694, %v740
    %v745 = vmul.f32 %v695, %v741
    %v746 = vadd.f32 %v676, %v742
    %v747 = vadd.f32 %v677, %v743
    %v748 = vadd.f32 %v678, %v744
    %v749 = vadd.f32 %v679, %v745
    %v750 = vsub.f32 %v91, %v79
    %v751 = vsub.f32 %v92, %v80
    %v752 = vsub.f32 %v93, %v81
    %v753 = vsub.f32 %v94, %v82
    %v754 = vmax.f32 %v750, 0.0
    %v755 = vmax.f32 %v751, 0.0
    %v756 = vmax.f32 %v752, 0.0
    %v757 = vmax.f32 %v753, 0.0
    %s758 = scalar_lea.vmem [#allocation5], 24
    %v759 = vld [vmem:[%s758] sm:$0xff]
    %v760 = vunpack.c.0.s8 %v759
    %v761 = vunpack.c.1.s8 %v759
    %v762 = vunpack.c.2.s8 %v759
    %v763 = vunpack.c.3.s8 %v759
    %v764 = vcvt.s32.f32 %v760
    %v765 = vcvt.s32.f32 %v761
    %v766 = vcvt.s32.f32 %v762
    %v767 = vcvt.s32.f32 %v763
    %v768 = vmul.f32 %v754, %v764
    %v769 = vmul.f32 %v755, %v765
    %v770 = vmul.f32 %v756, %v766
    %v771 = vmul.f32 %v757, %v767
    %v772 = vadd.f32 %v710, %v768
    %v773 = vadd.f32 %v711, %v769
    %v774 = vadd.f32 %v712, %v770
    %v775 = vadd.f32 %v713, %v771
    %s776 = scalar_lea.vmem [#allocation5], 152
    %v777 = vld [vmem:[%s776] sm:$0xff]
    %v778 = vunpack.c.0.s8 %v777
    %v779 = vunpack.c.1.s8 %v777
    %v780 = vunpack.c.2.s8 %v777
    %v781 = vunpack.c.3.s8 %v777
    %v782 = vcvt.s32.f32 %v778
    %v783 = vcvt.s32.f32 %v779
    %v784 = vcvt.s32.f32 %v780
    %v785 = vcvt.s32.f32 %v781
    %v786 = vmul.f32 %v754, %v782
    %v787 = vmul.f32 %v755, %v783
    %v788 = vmul.f32 %v756, %v784
    %v789 = vmul.f32 %v757, %v785
    %v790 = vadd.f32 %v728, %v786
    %v791 = vadd.f32 %v729, %v787
    %v792 = vadd.f32 %v730, %v788
    %v793 = vadd.f32 %v731, %v789
    %s794 = scalar_lea.vmem [#allocation5], 280
    %v795 = vld [vmem:[%s794] sm:$0xff]
    %v796 = vunpack.c.0.s8 %v795
    %v797 = vunpack.c.1.s8 %v795
    %v798 = vunpack.c.2.s8 %v795
    %v799 = vunpack.c.3.s8 %v795
    %v800 = vcvt.s32.f32 %v796
    %v801 = vcvt.s32.f32 %v797
    %v802 = vcvt.s32.f32 %v798
    %v803 = vcvt.s32.f32 %v799
    %v804 = vmul.f32 %v754, %v800
    %v805 = vmul.f32 %v755, %v801
    %v806 = vmul.f32 %v756, %v802
    %v807 = vmul.f32 %v757, %v803
    %v808 = vadd.f32 %v746, %v804
    %v809 = vadd.f32 %v747, %v805
    %v810 = vadd.f32 %v748, %v806
    %v811 = vadd.f32 %v749, %v807
    %v812 = vmin.f32 %v87, %v66
    %v813 = vmin.f32 %v88, %v67
    %v814 = vmin.f32 %v89, %v68
    %v815 = vmin.f32 %v90, %v69
    %v816 = vsub.f32 %v812, %v75
    %v817 = vsub.f32 %v813, %v76
    %v818 = vsub.f32 %v814, %v77
    %v819 = vsub.f32 %v815, %v78
    %v820 = vmax.f32 %v816, 0.0
    %v821 = vmax.f32 %v817, 0.0
    %v822 = vmax.f32 %v818, 0.0
    %v823 = vmax.f32 %v819, 0.0
    %s824 = scalar_lea.vmem [#allocation5], 112
    %v825 = vld [vmem:[%s824] sm:$0xff]
    %v826 = vunpack.c.0.s8 %v825
    %v827 = vunpack.c.1.s8 %v825
    %v828 = vunpack.c.2.s8 %v825
    %v829 = vunpack.c.3.s8 %v825
    %v830 = vcvt.s32.f32 %v826
    %v831 = vcvt.s32.f32 %v827
    %v832 = vcvt.s32.f32 %v828
    %v833 = vcvt.s32.f32 %v829
    %v834 = vmul.f32 %v820, %v830
    %v835 = vmul.f32 %v821, %v831
    %v836 = vmul.f32 %v822, %v832
    %v837 = vmul.f32 %v823, %v833
    %v838 = vadd.f32 %v772, %v834
    %v839 = vadd.f32 %v773, %v835
    %v840 = vadd.f32 %v774, %v836
    %v841 = vadd.f32 %v775, %v837
    %s842 = scalar_lea.vmem [#allocation5], 240
    %v843 = vld [vmem:[%s842] sm:$0xff]
    %v844 = vunpack.c.0.s8 %v843
    %v845 = vunpack.c.1.s8 %v843
    %v846 = vunpack.c.2.s8 %v843
    %v847 = vunpack.c.3.s8 %v843
    %v848 = vcvt.s32.f32 %v844
    %v849 = vcvt.s32.f32 %v845
    %v850 = vcvt.s32.f32 %v846
    %v851 = vcvt.s32.f32 %v847
    %v852 = vmul.f32 %v820, %v848
    %v853 = vmul.f32 %v821, %v849
    %v854 = vmul.f32 %v822, %v850
    %v855 = vmul.f32 %v823, %v851
    %v856 = vadd.f32 %v790, %v852
    %v857 = vadd.f32 %v791, %v853
    %v858 = vadd.f32 %v792, %v854
    %v859 = vadd.f32 %v793, %v855
    %s860 = scalar_lea.vmem [#allocation5], 368
    %v861 = vld [vmem:[%s860] sm:$0xff]
    %v862 = vunpack.c.0.s8 %v861
    %v863 = vunpack.c.1.s8 %v861
    %v864 = vunpack.c.2.s8 %v861
    %v865 = vunpack.c.3.s8 %v861
    %v866 = vcvt.s32.f32 %v862
    %v867 = vcvt.s32.f32 %v863
    %v868 = vcvt.s32.f32 %v864
    %v869 = vcvt.s32.f32 %v865
    %v870 = vmul.f32 %v820, %v866
    %v871 = vmul.f32 %v821, %v867
    %v872 = vmul.f32 %v822, %v868
    %v873 = vmul.f32 %v823, %v869
    %v874 = vadd.f32 %v808, %v870
    %v875 = vadd.f32 %v809, %v871
    %v876 = vadd.f32 %v810, %v872
    %v877 = vadd.f32 %v811, %v873
    %v878 = vmin.f32 %v87, %v75
    %v879 = vmin.f32 %v88, %v76
    %v880 = vmin.f32 %v89, %v77
    %v881 = vmin.f32 %v90, %v78
    %v882 = vsub.f32 %v878, %v66
    %v883 = vsub.f32 %v879, %v67
    %v884 = vsub.f32 %v880, %v68
    %v885 = vsub.f32 %v881, %v69
    %v886 = vmax.f32 %v882, 0.0
    %v887 = vmax.f32 %v883, 0.0
    %v888 = vmax.f32 %v884, 0.0
    %v889 = vmax.f32 %v885, 0.0
    %s890 = scalar_lea.vmem [#allocation5], 104
    %v891 = vld [vmem:[%s890] sm:$0xff]
    %v892 = vunpack.c.0.s8 %v891
    %v893 = vunpack.c.1.s8 %v891
    %v894 = vunpack.c.2.s8 %v891
    %v895 = vunpack.c.3.s8 %v891
    %v896 = vcvt.s32.f32 %v892
    %v897 = vcvt.s32.f32 %v893
    %v898 = vcvt.s32.f32 %v894
    %v899 = vcvt.s32.f32 %v895
    %v900 = vmul.f32 %v886, %v896
    %v901 = vmul.f32 %v887, %v897
    %v902 = vmul.f32 %v888, %v898
    %v903 = vmul.f32 %v889, %v899
    %v904 = vadd.f32 %v838, %v900
    %v905 = vadd.f32 %v839, %v901
    %v906 = vadd.f32 %v840, %v902
    %v907 = vadd.f32 %v841, %v903
    %s908 = scalar_lea.vmem [#allocation5], 232
    %v909 = vld [vmem:[%s908] sm:$0xff]
    %v910 = vunpack.c.0.s8 %v909
    %v911 = vunpack.c.1.s8 %v909
    %v912 = vunpack.c.2.s8 %v909
    %v913 = vunpack.c.3.s8 %v909
    %v914 = vcvt.s32.f32 %v910
    %v915 = vcvt.s32.f32 %v911
    %v916 = vcvt.s32.f32 %v912
    %v917 = vcvt.s32.f32 %v913
    %v918 = vmul.f32 %v886, %v914
    %v919 = vmul.f32 %v887, %v915
    %v920 = vmul.f32 %v888, %v916
    %v921 = vmul.f32 %v889, %v917
    %v922 = vadd.f32 %v856, %v918
    %v923 = vadd.f32 %v857, %v919
    %v924 = vadd.f32 %v858, %v920
    %v925 = vadd.f32 %v859, %v921
    %s926 = scalar_lea.vmem [#allocation5], 360
    %v927 = vld [vmem:[%s926] sm:$0xff]
    %v928 = vunpack.c.0.s8 %v927
    %v929 = vunpack.c.1.s8 %v927
    %v930 = vunpack.c.2.s8 %v927
    %v931 = vunpack.c.3.s8 %v927
    %v932 = vcvt.s32.f32 %v928
    %v933 = vcvt.s32.f32 %v929
    %v934 = vcvt.s32.f32 %v930
    %v935 = vcvt.s32.f32 %v931
    %v936 = vmul.f32 %v886, %v932
    %v937 = vmul.f32 %v887, %v933
    %v938 = vmul.f32 %v888, %v934
    %v939 = vmul.f32 %v889, %v935
    %v940 = vadd.f32 %v874, %v936
    %v941 = vadd.f32 %v875, %v937
    %v942 = vadd.f32 %v876, %v938
    %v943 = vadd.f32 %v877, %v939
    %v944 = vmin.f32 %v91, %v48
    %v945 = vmin.f32 %v92, %v49
    %v946 = vmin.f32 %v93, %v50
    %v947 = vmin.f32 %v94, %v51
    %v948 = vsub.f32 %v944, %v57
    %v949 = vsub.f32 %v945, %v58
    %v950 = vsub.f32 %v946, %v59
    %v951 = vsub.f32 %v947, %v60
    %v952 = vmax.f32 %v948, 0.0
    %v953 = vmax.f32 %v949, 0.0
    %v954 = vmax.f32 %v950, 0.0
    %v955 = vmax.f32 %v951, 0.0
    %s956 = scalar_lea.vmem [#allocation5], 88
    %v957 = vld [vmem:[%s956] sm:$0xff]
    %v958 = vunpack.c.0.s8 %v957
    %v959 = vunpack.c.1.s8 %v957
    %v960 = vunpack.c.2.s8 %v957
    %v961 = vunpack.c.3.s8 %v957
    %v962 = vcvt.s32.f32 %v958
    %v963 = vcvt.s32.f32 %v959
    %v964 = vcvt.s32.f32 %v960
    %v965 = vcvt.s32.f32 %v961
    %v966 = vmul.f32 %v952, %v962
    %v967 = vmul.f32 %v953, %v963
    %v968 = vmul.f32 %v954, %v964
    %v969 = vmul.f32 %v955, %v965
    %v970 = vadd.f32 %v904, %v966
    %v971 = vadd.f32 %v905, %v967
    %v972 = vadd.f32 %v906, %v968
    %v973 = vadd.f32 %v907, %v969
    %s974 = scalar_lea.vmem [#allocation5], 216
    %v975 = vld [vmem:[%s974] sm:$0xff]
    %v976 = vunpack.c.0.s8 %v975
    %v977 = vunpack.c.1.s8 %v975
    %v978 = vunpack.c.2.s8 %v975
    %v979 = vunpack.c.3.s8 %v975
    %v980 = vcvt.s32.f32 %v976
    %v981 = vcvt.s32.f32 %v977
    %v982 = vcvt.s32.f32 %v978
    %v983 = vcvt.s32.f32 %v979
    %v984 = vmul.f32 %v952, %v980
    %v985 = vmul.f32 %v953, %v981
    %v986 = vmul.f32 %v954, %v982
    %v987 = vmul.f32 %v955, %v983
    %v988 = vadd.f32 %v922, %v984
    %v989 = vadd.f32 %v923, %v985
    %v990 = vadd.f32 %v924, %v986
    %v991 = vadd.f32 %v925, %v987
    %s992 = scalar_lea.vmem [#allocation5], 344
    %v993 = vld [vmem:[%s992] sm:$0xff]
    %v994 = vunpack.c.0.s8 %v993
    %v995 = vunpack.c.1.s8 %v993
    %v996 = vunpack.c.2.s8 %v993
    %v997 = vunpack.c.3.s8 %v993
    %v998 = vcvt.s32.f32 %v994
    %v999 = vcvt.s32.f32 %v995
    %v1000 = vcvt.s32.f32 %v996
    %v1001 = vcvt.s32.f32 %v997
    %v1002 = vmul.f32 %v952, %v998
    %v1003 = vmul.f32 %v953, %v999
    %v1004 = vmul.f32 %v954, %v1000
    %v1005 = vmul.f32 %v955, %v1001
    %v1006 = vadd.f32 %v940, %v1002
    %v1007 = vadd.f32 %v941, %v1003
    %v1008 = vadd.f32 %v942, %v1004
    %v1009 = vadd.f32 %v943, %v1005
    %v1010 = vmin.f32 %v91, %v57
    %v1011 = vmin.f32 %v92, %v58
    %v1012 = vmin.f32 %v93, %v59
    %v1013 = vmin.f32 %v94, %v60
    %v1014 = vsub.f32 %v1010, %v48
    %v1015 = vsub.f32 %v1011, %v49
    %v1016 = vsub.f32 %v1012, %v50
    %v1017 = vsub.f32 %v1013, %v51
    %v1018 = vmax.f32 %v1014, 0.0
    %v1019 = vmax.f32 %v1015, 0.0
    %v1020 = vmax.f32 %v1016, 0.0
    %v1021 = vmax.f32 %v1017, 0.0
    %s1022 = scalar_lea.vmem [#allocation5], 56
    %v1023 = vld [vmem:[%s1022] sm:$0xff]
    %v1024 = vunpack.c.0.s8 %v1023
    %v1025 = vunpack.c.1.s8 %v1023
    %v1026 = vunpack.c.2.s8 %v1023
    %v1027 = vunpack.c.3.s8 %v1023
    %v1028 = vcvt.s32.f32 %v1024
    %v1029 = vcvt.s32.f32 %v1025
    %v1030 = vcvt.s32.f32 %v1026
    %v1031 = vcvt.s32.f32 %v1027
    %v1032 = vmul.f32 %v1018, %v1028
    %v1033 = vmul.f32 %v1019, %v1029
    %v1034 = vmul.f32 %v1020, %v1030
    %v1035 = vmul.f32 %v1021, %v1031
    %v1036 = vadd.f32 %v970, %v1032
    %v1037 = vadd.f32 %v971, %v1033
    %v1038 = vadd.f32 %v972, %v1034
    %v1039 = vadd.f32 %v973, %v1035
    %s1040 = scalar_lea.vmem [#allocation5], 184
    %v1041 = vld [vmem:[%s1040] sm:$0xff]
    %v1042 = vunpack.c.0.s8 %v1041
    %v1043 = vunpack.c.1.s8 %v1041
    %v1044 = vunpack.c.2.s8 %v1041
    %v1045 = vunpack.c.3.s8 %v1041
    %v1046 = vcvt.s32.f32 %v1042
    %v1047 = vcvt.s32.f32 %v1043
    %v1048 = vcvt.s32.f32 %v1044
    %v1049 = vcvt.s32.f32 %v1045
    %v1050 = vmul.f32 %v1018, %v1046
    %v1051 = vmul.f32 %v1019, %v1047
    %v1052 = vmul.f32 %v1020, %v1048
    %v1053 = vmul.f32 %v1021, %v1049
    %v1054 = vadd.f32 %v988, %v1050
    %v1055 = vadd.f32 %v989, %v1051
    %v1056 = vadd.f32 %v990, %v1052
    %v1057 = vadd.f32 %v991, %v1053
    %s1058 = scalar_lea.vmem [#allocation5], 312
    %v1059 = vld [vmem:[%s1058] sm:$0xff]
    %v1060 = vunpack.c.0.s8 %v1059
    %v1061 = vunpack.c.1.s8 %v1059
    %v1062 = vunpack.c.2.s8 %v1059
    %v1063 = vunpack.c.3.s8 %v1059
    %v1064 = vcvt.s32.f32 %v1060
    %v1065 = vcvt.s32.f32 %v1061
    %v1066 = vcvt.s32.f32 %v1062
    %v1067 = vcvt.s32.f32 %v1063
    %v1068 = vmul.f32 %v1018, %v1064
    %v1069 = vmul.f32 %v1019, %v1065
    %v1070 = vmul.f32 %v1020, %v1066
    %v1071 = vmul.f32 %v1021, %v1067
    %v1072 = vadd.f32 %v1006, %v1068
    %v1073 = vadd.f32 %v1007, %v1069
    %v1074 = vadd.f32 %v1008, %v1070
    %v1075 = vadd.f32 %v1009, %v1071
    %v1076 = vmin.f32 %v87, %v91
    %v1077 = vmin.f32 %v88, %v92
    %v1078 = vmin.f32 %v89, %v93
    %v1079 = vmin.f32 %v90, %v94
    %s1080 = scalar_lea.vmem [#allocation5], 120
    %v1081 = vld [vmem:[%s1080] sm:$0xff]
    %v1082 = vunpack.c.0.s8 %v1081
    %v1083 = vunpack.c.1.s8 %v1081
    %v1084 = vunpack.c.2.s8 %v1081
    %v1085 = vunpack.c.3.s8 %v1081
    %v1086 = vcvt.s32.f32 %v1082
    %v1087 = vcvt.s32.f32 %v1083
    %v1088 = vcvt.s32.f32 %v1084
    %v1089 = vcvt.s32.f32 %v1085
    %v1090 = vmul.f32 %v1076, %v1086
    %v1091 = vmul.f32 %v1077, %v1087
    %v1092 = vmul.f32 %v1078, %v1088
    %v1093 = vmul.f32 %v1079, %v1089
    %v1094 = vadd.f32 %v1036, %v1090
    %v1095 = vadd.f32 %v1037, %v1091
    %v1096 = vadd.f32 %v1038, %v1092
    %v1097 = vadd.f32 %v1039, %v1093
    %s1098 = scalar_lea.vmem [#allocation5], 248
    %v1099 = vld [vmem:[%s1098] sm:$0xff]
    %v1100 = vunpack.c.0.s8 %v1099
    %v1101 = vunpack.c.1.s8 %v1099
    %v1102 = vunpack.c.2.s8 %v1099
    %v1103 = vunpack.c.3.s8 %v1099
    %v1104 = vcvt.s32.f32 %v1100
    %v1105 = vcvt.s32.f32 %v1101
    %v1106 = vcvt.s32.f32 %v1102
    %v1107 = vcvt.s32.f32 %v1103
    %v1108 = vmul.f32 %v1076, %v1104
    %v1109 = vmul.f32 %v1077, %v1105
    %v1110 = vmul.f32 %v1078, %v1106
    %v1111 = vmul.f32 %v1079, %v1107
    %v1112 = vadd.f32 %v1054, %v1108
    %v1113 = vadd.f32 %v1055, %v1109
    %v1114 = vadd.f32 %v1056, %v1110
    %v1115 = vadd.f32 %v1057, %v1111
    %s1116 = scalar_lea.vmem [#allocation5], 376
    %v1117 = vld [vmem:[%s1116] sm:$0xff]
    %v1118 = vunpack.c.0.s8 %v1117
    %v1119 = vunpack.c.1.s8 %v1117
    %v1120 = vunpack.c.2.s8 %v1117
    %v1121 = vunpack.c.3.s8 %v1117
    %v1122 = vcvt.s32.f32 %v1118
    %v1123 = vcvt.s32.f32 %v1119
    %v1124 = vcvt.s32.f32 %v1120
    %v1125 = vcvt.s32.f32 %v1121
    %v1126 = vmul.f32 %v1076, %v1122
    %v1127 = vmul.f32 %v1077, %v1123
    %v1128 = vmul.f32 %v1078, %v1124
    %v1129 = vmul.f32 %v1079, %v1125
    %v1130 = vadd.f32 %v1072, %v1126
    %v1131 = vadd.f32 %v1073, %v1127
    %v1132 = vadd.f32 %v1074, %v1128
    %v1133 = vadd.f32 %v1075, %v1129
    %v1134 = vmul.f32 %v1094, 0.0625
    %v1135 = vmul.f32 %v1095, 0.0625
    %v1136 = vmul.f32 %v1096, 0.0625
    %v1137 = vmul.f32 %v1097, 0.0625
    %1138 = vst [vmem:[#allocation7] sm:$0xff] %v1134
    %1139 = vst [vmem:[#allocation7 + $0x8] sm:$0xff] %v1135
    %1140 = vst [vmem:[#allocation7 + $0x10] sm:$0xff] %v1136
    %1141 = vst [vmem:[#allocation7 + $0x18] sm:$0xff] %v1137
    %v1142 = vmul.f32 %v1112, 0.0625
    %v1143 = vmul.f32 %v1113, 0.0625
    %v1144 = vmul.f32 %v1114, 0.0625
    %v1145 = vmul.f32 %v1115, 0.0625
    %s1146 = scalar_lea.vmem [#allocation7], 32
    %1147 = vst [vmem:[%s1146] sm:$0xff] %v1142
    %1148 = vst [vmem:[%s1146 + $0x8] sm:$0xff] %v1143
    %1149 = vst [vmem:[%s1146 + $0x10] sm:$0xff] %v1144
    %1150 = vst [vmem:[%s1146 + $0x18] sm:$0xff] %v1145
    %v1151 = vmul.f32 %v1130, 0.0625
    %v1152 = vmul.f32 %v1131, 0.0625
    %v1153 = vmul.f32 %v1132, 0.0625
    %v1154 = vmul.f32 %v1133, 0.0625
    %s1155 = scalar_lea.vmem [#allocation7], 64
    %1156 = vst [vmem:[%s1155] sm:$0xff] %v1151
    %1157 = vst [vmem:[%s1155 + $0x8] sm:$0xff] %v1152
    %1158 = vst [vmem:[%s1155 + $0x10] sm:$0xff] %v1153
    %1159 = vst [vmem:[%s1155 + $0x18] sm:$0xff] %v1154
    // Predicated region
    $region18: #{tpu_custom_call.1} parent=1 // pred_check
      _
    $region19: #{tpu_custom_call.1} parent=1 // pred_check_branch
      %1161 = sbr.rel (0) target = $region21
    $region20: #{tpu_custom_call.1} parent=1 // pred_region
      %1163 = vsyncadd [#allocation4], 0
      %s1164 = sshll.u32 [#allocation7], 4
      %s1165 = int_to_ptr.vmem [resolvable:$true] %s1164
      %s1166 = sshll.u32 %s2, 4
      %s1167 = int_to_ptr.hbm [resolvable:$true] %s1166
      %1172 = dma.vmem_to_hbm [thread:$0]  %s1165, 1536, %s1167, [#allocation4], 128, 128, 8
    $region21: #{tpu_custom_call.1} parent=1 // pred_fallthru
      _
    // Predicated region
    $region22: #{tpu_custom_call.1} parent=1 // pred_check
      _
    $region23: #{tpu_custom_call.1} parent=1 // pred_check_branch
      %1174 = sbr.rel (0) target = $region25
    $region24: #{tpu_custom_call.1} parent=1 // pred_region
      %1176 = dma.done [#allocation4], 1536
    $region25: #{tpu_custom_call.1} parent=1 // pred_fallthru
      _
    %1177 = vsyncpa [#allocation3], 1
    %1178 = vsyncpa [#allocation6], 1
    %1179 = vsyncpa [#allocation4], 1

</llo_original>
